<compile_context>
chip_gen: v7x
topology: tpu7x:2x2x1
jax: 0.10.0
libtpu: 0.0.40
codegen_flags: <defaults>
</compile_context>

<pallas_src>
import functools

import numpy as np
import jax
import jax.numpy as jnp
from jax import lax
from jax.experimental import pallas as pl
from jax.experimental.pallas import tpu as pltpu

EPS = 1e-5
LANE = 128                      # channel dims padded to a multiple of this
SUBLANE = 8                     # f32 sublane width: row tiles multiple of this
_VMEM_TILE_BUDGET = 40 * 1024 * 1024   # per-stage buffer budget (fits v7x 64 MiB)
_MAX_TILE_ROWS = 1024           # matmul-stage row-tile cap
_MAX_TILE_ROWS_EW = 2048        # elementwise stage-3 row-tile cap


def _round_up(v, m):
    return (v + m - 1) // m * m


def _cdiv(a, b):
    return (a + b - 1) // b


def _pad2(a, rows, cols):
    r, c = a.shape
    if r == rows and c == cols:
        return a
    return jnp.pad(a, ((0, rows - r), (0, cols - c)))


# --------------------------------------------------------------------------
# stage 1: fused [identity-projection | Linear1] matmul + BN1 partial stats
# --------------------------------------------------------------------------
def _stage1_proj_kernel(c_p, x_ref, w01_ref, idn_ref, h1_ref, sum_ref, ssq_ref):
    y = jnp.dot(x_ref[...], w01_ref[...], preferred_element_type=jnp.float32)
    idn = y[:, :c_p]                 # identity-projection columns
    h1 = y[:, c_p:]                  # Linear1 columns (bias cancels in BN1)
    idn_ref[...] = idn.astype(idn_ref.dtype)
    h1_ref[...] = h1.astype(h1_ref.dtype)
    # Padded batch rows of x are zero and there is no bias, so they contribute
    # exactly zero to these sums -> no row mask needed for BN1 stats.
    sum_ref[...] = jnp.sum(h1, axis=0, keepdims=True)[None]
    ssq_ref[...] = jnp.sum(h1 * h1, axis=0, keepdims=True)[None]


def _stage1_kernel(x_ref, w1_ref, h1_ref, sum_ref, ssq_ref):
    # Cin == Cout: nn.Identity path, no projection matmul at all.
    h1 = jnp.dot(x_ref[...], w1_ref[...], preferred_element_type=jnp.float32)
    h1_ref[...] = h1.astype(h1_ref.dtype)
    sum_ref[...] = jnp.sum(h1, axis=0, keepdims=True)[None]
    ssq_ref[...] = jnp.sum(h1 * h1, axis=0, keepdims=True)[None]


# --------------------------------------------------------------------------
# stage 2: folded BN1 + ReLU + Linear2 + BN2 partial stats
# --------------------------------------------------------------------------
def _stage2_kernel(n_valid, tile_n, need_mask,
                   h1_ref, scale1_ref, shift1_ref, w2_ref,
                   h2_ref, sum_ref, ssq_ref):
    h = jnp.maximum(
        h1_ref[...].astype(jnp.float32) * scale1_ref[...] + shift1_ref[...], 0.0)
    h2 = jnp.dot(h.astype(w2_ref.dtype), w2_ref[...],
                 preferred_element_type=jnp.float32)
    h2_ref[...] = h2.astype(h2_ref.dtype)
    if need_mask:
        # BN1's shift makes padded (zero) rows non-zero after the ReLU, so
        # rows >= the true batch size must be excluded from the BN2 sums.
        rows = lax.broadcasted_iota(jnp.int32, (tile_n, 1), 0)
        valid = rows < (n_valid - pl.program_id(0) * tile_n)
        h2 = jnp.where(valid, h2, 0.0)
    sum_ref[...] = jnp.sum(h2, axis=0, keepdims=True)[None]
    ssq_ref[...] = jnp.sum(h2 * h2, axis=0, keepdims=True)[None]


# --------------------------------------------------------------------------
# stage 3: folded BN2 + residual add + ReLU  (pure elementwise, HBM-bound)
# --------------------------------------------------------------------------
def _stage3_kernel(h2_ref, idn_ref, scale2_ref, shift2_ref, o_ref):
    o_ref[...] = jnp.maximum(
        h2_ref[...].astype(jnp.float32) * scale2_ref[...] + shift2_ref[...]
        + idn_ref[...].astype(jnp.float32), 0.0)


def _fold_bn(sum_parts, ssq_parts, n, gamma_p, beta_p):
    """Fold training-mode BN (biased variance) into per-channel scale/shift."""
    s = jnp.sum(sum_parts, axis=(0, 1))[None, :]          # (1, C_P)
    ss = jnp.sum(ssq_parts, axis=(0, 1))[None, :]
    mean = s / n
    var = jnp.maximum(ss / n - mean * mean, 0.0)
    scale = gamma_p * lax.rsqrt(var + EPS)
    shift = beta_p - mean * scale
    return scale, shift


def _pick_matmul_tile(n, c_in_p, c_p, mm_b, has_proj):
    """Row-tile for the matmul stages: as big as the VMEM budget allows, but
    aiming for >= 2 grid steps so v7x's two TensorCores both get work."""
    n8 = _round_up(max(n, 1), SUBLANE)
    wide = 2 * c_p if has_proj else c_p
    resident = max(c_in_p * wide * mm_b,                   # stage-1 weights
                   c_p * c_p * mm_b + 2 * c_p * 4)         # stage-2 weights
    per_row = 2 * max((c_in_p + wide) * mm_b,              # stage 1 (in + out)
                      2 * c_p * mm_b)                      # stage 2 (in + out)
    cap = (_VMEM_TILE_BUDGET - resident) // max(per_row, 1)
    cap = max(SUBLANE, min(_MAX_TILE_ROWS, cap // SUBLANE * SUBLANE))
    target = _round_up(_cdiv(n8, 2), SUBLANE) if n8 >= 2 * SUBLANE else n8
    return int(min(cap, max(SUBLANE, target)))


def _pick_epilogue_tile(n_p, tile_n, c_p, h2_b, idn_b):
    """Stage 3 is pure elementwise: give it the fattest tile that fits."""
    num_tiles = n_p // tile_n
    per_row = 2 * (c_p * (h2_b + idn_b) + c_p * 4)
    for d in range(num_tiles, 0, -1):
        rows = d * tile_n
        if (num_tiles % d == 0 and rows <= _MAX_TILE_ROWS_EW
                and rows * per_row + 2 * c_p * 4 <= _VMEM_TILE_BUDGET):
            return rows
    return tile_n


def res_block_up_flat(x, params, *, use_bf16_matmul=True, tile_n=None):
    """x: (N, Cin) f32.  Returns (N, Cout) f32 (training-mode BatchNorm)."""
    n, c_in = x.shape
    c_out = params["w1"].shape[1]
    f32 = jnp.float32
    mm_dtype = jnp.bfloat16 if use_bf16_matmul else f32
    mm_b = jnp.dtype(mm_dtype).itemsize

    c_in_p = _round_up(c_in, LANE)
    c_p = _round_up(c_out, LANE)
    has_proj = c_in != c_out
    wide = 2 * c_p if has_proj else c_p
    idn_b = mm_b if has_proj else 4

    if tile_n is None:
        tile_n = _pick_matmul_tile(n, c_in_p, c_p, mm_b, has_proj)
    assert tile_n % SUBLANE == 0
    n_p = _round_up(n, tile_n)          # zero-pad ragged batches (stats masked)
    num_tiles = n_p // tile_n
    need_mask = n_p != n
    tile_n3 = _pick_epilogue_tile(n_p, tile_n, c_p, mm_b, idn_b)

    # -------- host-side padding / casting --------
    x_p = _pad2(x.astype(f32), n_p, c_in_p)      # exact f32 copy for Identity
    x_mm = x_p.astype(mm_dtype)
    w1_p = _pad2(params["w1"], c_in_p, c_p).astype(mm_dtype)
    w2_p = _pad2(params["w2"], c_p, c_p).astype(mm_dtype)
    # gamma padded with ZEROS so padded channels stay exactly zero through BN.
    g1_p = _pad2(params["g1"], 1, c_p)
    be1_p = _pad2(params["be1"], 1, c_p)
    g2_p = _pad2(params["g2"], 1, c_p)
    be2_p = _pad2(params["be2"], 1, c_p)
    # NOTE: Linear biases b1/b2 are intentionally unused in the kernels — under
    # training-mode BatchNorm a per-channel bias is removed by the batch mean.

    # -------- specs --------
    row = lambda cols: pl.BlockSpec((tile_n, cols), lambda i: (i, 0))
    row3 = lambda: pl.BlockSpec((tile_n3, c_p), lambda i: (i, 0))
    # constant-index blocks: fetched once -> single-buffer them (v7x VMEM).
    resident = lambda shape: pl.BlockSpec(
        shape, lambda i: (0,) * len(shape), pipeline_mode=pl.Buffered(1))
    stat_spec = pl.BlockSpec((1, 1, c_p), lambda i: (i, 0, 0))
    stat_shape = jax.ShapeDtypeStruct((num_tiles, 1, c_p), f32)

    # -------- VMEM limit derived from the actual buffers (not a fixed cap) ----
    stage1_b = (2 * tile_n * (c_in_p + wide) * mm_b
                + c_in_p * wide * mm_b + 4 * 2 * c_p * 4)
    stage2_b = (2 * tile_n * 2 * c_p * mm_b
                + c_p * c_p * mm_b + 2 * c_p * 4 + 4 * 2 * c_p * 4)
    stage3_b = 2 * tile_n3 * c_p * (mm_b + idn_b + 4) + 2 * c_p * 4
    need = max(stage1_b, stage2_b, stage3_b)
    vmem_limit = int(min(100 << 20, max(32 << 20, need + need // 4)))
    cparams = pltpu.CompilerParams(dimension_semantics=("parallel",),
                                   vmem_limit_bytes=vmem_limit)

    # -------- stage 1: x @ [Wid | W1] (+ BN1 partial stats) --------
    if has_proj:
        wid_p = _pad2(params["wid"], c_in_p, c_p).astype(mm_dtype)
        w01 = jnp.concatenate([wid_p, w1_p], axis=1)       # (Cin_p, 2*C_P)
        idn, h1, s1, q1 = pl.pallas_call(
            functools.partial(_stage1_proj_kernel, c_p),
            grid=(num_tiles,),
            in_specs=[row(c_in_p), resident((c_in_p, 2 * c_p))],
            out_specs=[row(c_p), row(c_p), stat_spec, stat_spec],
            out_shape=[jax.ShapeDtypeStruct((n_p, c_p), mm_dtype),
                       jax.ShapeDtypeStruct((n_p, c_p), mm_dtype),
                       stat_shape, stat_shape],
            compiler_params=cparams,
        )(x_mm, w01)
    else:
        h1, s1, q1 = pl.pallas_call(
            _stage1_kernel,
            grid=(num_tiles,),
            in_specs=[row(c_in_p), resident((c_in_p, c_p))],
            out_specs=[row(c_p), stat_spec, stat_spec],
            out_shape=[jax.ShapeDtypeStruct((n_p, c_p), mm_dtype),
                       stat_shape, stat_shape],
            compiler_params=cparams,
        )(x_mm, w1_p)
        idn = x_p                                          # exact f32 residual

    scale1, shift1 = _fold_bn(s1, q1, n, g1_p, be1_p)

    # -------- stage 2: ReLU(BN1(h1)) @ W2 (+ BN2 partial stats) --------
    h2, s2, q2 = pl.pallas_call(
        functools.partial(_stage2_kernel, n, tile_n, need_mask),
        grid=(num_tiles,),
        in_specs=[row(c_p), resident((1, c_p)), resident((1, c_p)),
                  resident((c_p, c_p))],
        out_specs=[row(c_p), stat_spec, stat_spec],
        out_shape=[jax.ShapeDtypeStruct((n_p, c_p), mm_dtype),
                   stat_shape, stat_shape],
        compiler_params=cparams,
    )(h1, scale1, shift1, w2_p)

    scale2, shift2 = _fold_bn(s2, q2, n, g2_p, be2_p)

    # -------- stage 3: BN2 + residual + ReLU (fat elementwise tiles) --------
    out_p = pl.pallas_call(
        _stage3_kernel,
        grid=(n_p // tile_n3,),
        in_specs=[row3(), row3(), resident((1, c_p)), resident((1, c_p))],
        out_specs=row3(),
        out_shape=jax.ShapeDtypeStruct((n_p, c_p), f32),
        compiler_params=cparams,
    )(h2, idn, scale2, shift2)

    if n_p == n and c_p == c_out:
        return out_p
    # TODO(synk): skip this slice (an extra XLA copy) if the consumer accepts
    # the lane-padded layout.
    return out_p[:n, :c_out]


def init_params(key, c_in, c_out):
    """PyTorch-like init; BN gamma=1, beta=0.  Biases kept for the reference."""
    ks = jax.random.split(key, 5)
    lim1 = 1.0 / np.sqrt(c_in)
    lim2 = 1.0 / np.sqrt(c_out)
    p = {
        "w1": jax.random.uniform(ks[1], (c_in, c_out), jnp.float32, -lim1, lim1),
        "b1": jax.random.uniform(ks[2], (1, c_out), jnp.float32, -lim1, lim1),
        "g1": jnp.ones((1, c_out), jnp.float32),
        "be1": jnp.zeros((1, c_out), jnp.float32),
        "w2": jax.random.uniform(ks[3], (c_out, c_out), jnp.float32, -lim2, lim2),
        "b2": jax.random.uniform(ks[4], (1, c_out), jnp.float32, -lim2, lim2),
        "g2": jnp.ones((1, c_out), jnp.float32),
        "be2": jnp.zeros((1, c_out), jnp.float32),
    }
    if c_in != c_out:
        p["wid"] = jax.random.uniform(ks[0], (c_in, c_out), jnp.float32,
                                      -lim1, lim1)
    return p


def _reference(x, p):
    """Pure-JAX mirror of the PyTorch forward (training-mode BN, with biases)."""
    hp = lax.Precision.HIGHEST
    identity = jnp.dot(x, p["wid"], precision=hp) if "wid" in p else x
    out = jnp.dot(x, p["w1"], precision=hp) + p["b1"]
    m = out.mean(0, keepdims=True)
    v = ((out - m) ** 2).mean(0, keepdims=True)            # biased variance
    out = (out - m) / jnp.sqrt(v + EPS) * p["g1"] + p["be1"]
    out = jnp.maximum(out, 0.0)
    out = jnp.dot(out, p["w2"], precision=hp) + p["b2"]
    m = out.mean(0, keepdims=True)
    v = ((out - m) ** 2).mean(0, keepdims=True)
    out = (out - m) / jnp.sqrt(v + EPS) * p["g2"] + p["be2"]
    return jnp.maximum(out + identity, 0.0)


if __name__ == "__main__":
    key = jax.random.PRNGKey(0)

    def check(n, c_in, c_out, use_bf16, rtol, atol, seed_off):
        kx, kp = jax.random.split(jax.random.fold_in(key, seed_off))
        x = jax.random.normal(kx, (n, c_in), dtype=jnp.float32)
        params = init_params(kp, c_in, c_out)
        fwd = jax.jit(functools.partial(res_block_up_flat,
                                        use_bf16_matmul=use_bf16))
        out = jax.block_until_ready(fwd(x, params))
        ref = _reference(x, params)
        assert out.shape == (n, c_out)
        np.testing.assert_allclose(np.asarray(out), np.asarray(ref),
                                   rtol=rtol, atol=atol)

    # f32 MXU path vs exact f32 reference (tight): "Up" block with projection.
    check(64, 16, 32, use_bf16=False, rtol=1e-4, atol=1e-4, seed_off=0)
    # ragged batch + nn.Identity residual (Cin == Cout), masked BN2 stats.
    check(70, 24, 24, use_bf16=False, rtol=1e-4, atol=1e-4, seed_off=1)
    # default bf16 MXU path: looser tolerance for bf16 operand rounding.
    check(64, 16, 32, use_bf16=True, rtol=5e-2, atol=5e-2, seed_off=2)

    print("KERNEL_OK")
</pallas_src>

<mosaic_0001>
module attributes {stable_mosaic.version = 11 : i64} {
  func.func @_stage1_proj_kernel(%arg0: i32, %arg1: memref<32x128xf32, #tpu.memory_space<vmem>>, %arg2: memref<128x256xf32, #tpu.memory_space<vmem>>, %arg3: memref<32x128xf32, #tpu.memory_space<vmem>>, %arg4: memref<32x128xf32, #tpu.memory_space<vmem>>, %arg5: memref<1x1x128xf32, #tpu.memory_space<vmem>>, %arg6: memref<1x1x128xf32, #tpu.memory_space<vmem>>) attributes {dimension_semantics = [#tpu.dimension_semantics<parallel>], iteration_bounds = array<i64: 2>, scalar_prefetch = 0 : i64, scratch_operands = 0 : i64, tpu.core_type = #tpu.core_type<tc>, window_params = [{transform_indices = @transform_0, window_bounds = array<i64: 32, 128>}, {pipeline_mode = #tpu.pipeline_mode<synchronous>, transform_indices = @transform_1, window_bounds = array<i64: 128, 256>}, {transform_indices = @transform_2, window_bounds = array<i64: 32, 128>}, {transform_indices = @transform_3, window_bounds = array<i64: 32, 128>}, {transform_indices = @transform_4, window_bounds = array<i64: 1, 1, 128>}, {transform_indices = @transform_5, window_bounds = array<i64: 1, 1, 128>}]} {
    %c0 = arith.constant 0 : index
    %c0_0 = arith.constant 0 : index
    %0 = vector.load %arg1[%c0, %c0_0] : memref<32x128xf32, #tpu.memory_space<vmem>>, vector<32x128xf32>
    %c0_1 = arith.constant 0 : index
    %c0_2 = arith.constant 0 : index
    %1 = vector.load %arg2[%c0_1, %c0_2] : memref<128x256xf32, #tpu.memory_space<vmem>>, vector<128x256xf32>
    %cst = arith.constant dense<0.000000e+00> : vector<32x256xf32>
    %2 = tpu.matmul %0, %1, %cst {dimension_numbers = #tpu.dot_dimension_numbers<[1], [0], [0], [1], [0, 0, 1, 1], [], []>} : vector<32x128xf32>, vector<128x256xf32>, vector<32x256xf32> -> vector<32x256xf32>
    %3 = vector.extract_strided_slice %2 {offsets = [0, 0], sizes = [32, 128], strides = [1, 1]} : vector<32x256xf32> to vector<32x128xf32>
    %4 = vector.extract_strided_slice %2 {offsets = [0, 128], sizes = [32, 128], strides = [1, 1]} : vector<32x256xf32> to vector<32x128xf32>
    %c0_3 = arith.constant 0 : index
    %c0_4 = arith.constant 0 : index
    %5 = vector.load %arg3[%c0_3, %c0_4] : memref<32x128xf32, #tpu.memory_space<vmem>>, vector<32x128xf32>
    tpu.vector_store %arg3[%c0_3, %c0_4], %3 {strides = array<i32>} : memref<32x128xf32, #tpu.memory_space<vmem>>, vector<32x128xf32>,
    %c0_5 = arith.constant 0 : index
    %c0_6 = arith.constant 0 : index
    %6 = vector.load %arg4[%c0_5, %c0_6] : memref<32x128xf32, #tpu.memory_space<vmem>>, vector<32x128xf32>
    tpu.vector_store %arg4[%c0_5, %c0_6], %4 {strides = array<i32>} : memref<32x128xf32, #tpu.memory_space<vmem>>, vector<32x128xf32>,
    %cst_7 = arith.constant dense<0.000000e+00> : vector<128xf32>
    %7 = vector.multi_reduction <add>, %4, %cst_7 [0] : vector<32x128xf32> to vector<128xf32>
    %8 = vector.shape_cast %7 : vector<128xf32> to vector<1x128xf32>
    %9 = vector.shape_cast %8 : vector<1x128xf32> to vector<1x1x128xf32>
    %c0_8 = arith.constant 0 : index
    %c0_9 = arith.constant 0 : index
    %c0_10 = arith.constant 0 : index
    %10 = vector.load %arg5[%c0_8, %c0_9, %c0_10] : memref<1x1x128xf32, #tpu.memory_space<vmem>>, vector<1x1x128xf32>
    tpu.vector_store %arg5[%c0_8, %c0_9, %c0_10], %9 {strides = array<i32>} : memref<1x1x128xf32, #tpu.memory_space<vmem>>, vector<1x1x128xf32>,
    %11 = arith.mulf %4, %4 : vector<32x128xf32>
    %cst_11 = arith.constant dense<0.000000e+00> : vector<128xf32>
    %12 = vector.multi_reduction <add>, %11, %cst_11 [0] : vector<32x128xf32> to vector<128xf32>
    %13 = vector.shape_cast %12 : vector<128xf32> to vector<1x128xf32>
    %14 = vector.shape_cast %13 : vector<1x128xf32> to vector<1x1x128xf32>
    %c0_12 = arith.constant 0 : index
    %c0_13 = arith.constant 0 : index
    %c0_14 = arith.constant 0 : index
    %15 = vector.load %arg6[%c0_12, %c0_13, %c0_14] : memref<1x1x128xf32, #tpu.memory_space<vmem>>, vector<1x1x128xf32>
    tpu.vector_store %arg6[%c0_12, %c0_13, %c0_14], %14 {strides = array<i32>} : memref<1x1x128xf32, #tpu.memory_space<vmem>>, vector<1x1x128xf32>,
    return
  }
  func.func @transform_0(%arg0: i32) -> (i32, i32) {
    %c0_i32 = arith.constant 0 : i32
    %c0_i32_0 = arith.constant 0 : i32
    return %arg0, %c0_i32 : i32, i32
  }
  func.func @transform_1(%arg0: i32) -> (i32, i32) {
    %c0_i32 = arith.constant 0 : i32
    %c0_i32_0 = arith.constant 0 : i32
    %c0_i32_1 = arith.constant 0 : i32
    return %c0_i32, %c0_i32_0 : i32, i32
  }
  func.func @transform_2(%arg0: i32) -> (i32, i32) {
    %c0_i32 = arith.constant 0 : i32
    %c0_i32_0 = arith.constant 0 : i32
    return %arg0, %c0_i32 : i32, i32
  }
  func.func @transform_3(%arg0: i32) -> (i32, i32) {
    %c0_i32 = arith.constant 0 : i32
    %c0_i32_0 = arith.constant 0 : i32
    return %arg0, %c0_i32 : i32, i32
  }
  func.func @transform_4(%arg0: i32) -> (i32, i32, i32) {
    %c0_i32 = arith.constant 0 : i32
    %c0_i32_0 = arith.constant 0 : i32
    %c0_i32_1 = arith.constant 0 : i32
    return %arg0, %c0_i32, %c0_i32_0 : i32, i32, i32
  }
  func.func @transform_5(%arg0: i32) -> (i32, i32, i32) {
    %c0_i32 = arith.constant 0 : i32
    %c0_i32_0 = arith.constant 0 : i32
    %c0_i32_1 = arith.constant 0 : i32
    return %arg0, %c0_i32, %c0_i32_0 : i32, i32, i32
  }
}

module attributes {stable_mosaic.version = 11 : i64} {
  func.func @_stage2_kernel(%arg0: i32, %arg1: memref<32x128xf32, #tpu.memory_space<vmem>>, %arg2: memref<1x128xf32, #tpu.memory_space<vmem>>, %arg3: memref<1x128xf32, #tpu.memory_space<vmem>>, %arg4: memref<128x128xf32, #tpu.memory_space<vmem>>, %arg5: memref<32x128xf32, #tpu.memory_space<vmem>>, %arg6: memref<1x1x128xf32, #tpu.memory_space<vmem>>, %arg7: memref<1x1x128xf32, #tpu.memory_space<vmem>>) attributes {dimension_semantics = [#tpu.dimension_semantics<parallel>], iteration_bounds = array<i64: 2>, scalar_prefetch = 0 : i64, scratch_operands = 0 : i64, tpu.core_type = #tpu.core_type<tc>, window_params = [{transform_indices = @transform_0, window_bounds = array<i64: 32, 128>}, {pipeline_mode = #tpu.pipeline_mode<synchronous>, transform_indices = @transform_1, window_bounds = array<i64: 1, 128>}, {pipeline_mode = #tpu.pipeline_mode<synchronous>, transform_indices = @transform_2, window_bounds = array<i64: 1, 128>}, {pipeline_mode = #tpu.pipeline_mode<synchronous>, transform_indices = @transform_3, window_bounds = array<i64: 128, 128>}, {transform_indices = @transform_4, window_bounds = array<i64: 32, 128>}, {transform_indices = @transform_5, window_bounds = array<i64: 1, 1, 128>}, {transform_indices = @transform_6, window_bounds = array<i64: 1, 1, 128>}]} {
    %c0 = arith.constant 0 : index
    %c0_0 = arith.constant 0 : index
    %0 = vector.load %arg1[%c0, %c0_0] : memref<32x128xf32, #tpu.memory_space<vmem>>, vector<32x128xf32>
    %c0_1 = arith.constant 0 : index
    %c0_2 = arith.constant 0 : index
    %1 = vector.load %arg2[%c0_1, %c0_2] : memref<1x128xf32, #tpu.memory_space<vmem>>, vector<1x128xf32>
    %2 = vector.broadcast %1 : vector<1x128xf32> to vector<32x128xf32>
    %3 = arith.mulf %0, %2 : vector<32x128xf32>
    %c0_3 = arith.constant 0 : index
    %c0_4 = arith.constant 0 : index
    %4 = vector.load %arg3[%c0_3, %c0_4] : memref<1x128xf32, #tpu.memory_space<vmem>>, vector<1x128xf32>
    %5 = vector.broadcast %4 : vector<1x128xf32> to vector<32x128xf32>
    %6 = arith.addf %3, %5 : vector<32x128xf32>
    %cst = arith.constant 0.000000e+00 : f32
    %7 = vector.broadcast %cst : f32 to vector<32x128xf32>
    %8 = arith.maximumf %6, %7 : vector<32x128xf32>
    %c0_5 = arith.constant 0 : index
    %c0_6 = arith.constant 0 : index
    %9 = vector.load %arg4[%c0_5, %c0_6] : memref<128x128xf32, #tpu.memory_space<vmem>>, vector<128x128xf32>
    %cst_7 = arith.constant dense<0.000000e+00> : vector<32x128xf32>
    %10 = tpu.matmul %8, %9, %cst_7 {dimension_numbers = #tpu.dot_dimension_numbers<[1], [0], [0], [1], [0, 0, 1, 1], [], []>} : vector<32x128xf32>, vector<128x128xf32>, vector<32x128xf32> -> vector<32x128xf32>
    %c0_8 = arith.constant 0 : index
    %c0_9 = arith.constant 0 : index
    %11 = vector.load %arg5[%c0_8, %c0_9] : memref<32x128xf32, #tpu.memory_space<vmem>>, vector<32x128xf32>
    tpu.vector_store %arg5[%c0_8, %c0_9], %10 {strides = array<i32>} : memref<32x128xf32, #tpu.memory_space<vmem>>, vector<32x128xf32>,
    %cst_10 = arith.constant dense<0.000000e+00> : vector<128xf32>
    %12 = vector.multi_reduction <add>, %10, %cst_10 [0] : vector<32x128xf32> to vector<128xf32>
    %13 = vector.shape_cast %12 : vector<128xf32> to vector<1x128xf32>
    %14 = vector.shape_cast %13 : vector<1x128xf32> to vector<1x1x128xf32>
    %c0_11 = arith.constant 0 : index
    %c0_12 = arith.constant 0 : index
    %c0_13 = arith.constant 0 : index
    %15 = vector.load %arg6[%c0_11, %c0_12, %c0_13] : memref<1x1x128xf32, #tpu.memory_space<vmem>>, vector<1x1x128xf32>
    tpu.vector_store %arg6[%c0_11, %c0_12, %c0_13], %14 {strides = array<i32>} : memref<1x1x128xf32, #tpu.memory_space<vmem>>, vector<1x1x128xf32>,
    %16 = arith.mulf %10, %10 : vector<32x128xf32>
    %cst_14 = arith.constant dense<0.000000e+00> : vector<128xf32>
    %17 = vector.multi_reduction <add>, %16, %cst_14 [0] : vector<32x128xf32> to vector<128xf32>
    %18 = vector.shape_cast %17 : vector<128xf32> to vector<1x128xf32>
    %19 = vector.shape_cast %18 : vector<1x128xf32> to vector<1x1x128xf32>
    %c0_15 = arith.constant 0 : index
    %c0_16 = arith.constant 0 : index
    %c0_17 = arith.constant 0 : index
    %20 = vector.load %arg7[%c0_15, %c0_16, %c0_17] : memref<1x1x128xf32, #tpu.memory_space<vmem>>, vector<1x1x128xf32>
    tpu.vector_store %arg7[%c0_15, %c0_16, %c0_17], %19 {strides = array<i32>} : memref<1x1x128xf32, #tpu.memory_space<vmem>>, vector<1x1x128xf32>,
    return
  }
  func.func @transform_0(%arg0: i32) -> (i32, i32) {
    %c0_i32 = arith.constant 0 : i32
    %c0_i32_0 = arith.constant 0 : i32
    return %arg0, %c0_i32 : i32, i32
  }
  func.func @transform_1(%arg0: i32) -> (i32, i32) {
    %c0_i32 = arith.constant 0 : i32
    %c0_i32_0 = arith.constant 0 : i32
    %c0_i32_1 = arith.constant 0 : i32
    return %c0_i32, %c0_i32_0 : i32, i32
  }
  func.func @transform_2(%arg0: i32) -> (i32, i32) {
    %c0_i32 = arith.constant 0 : i32
    %c0_i32_0 = arith.constant 0 : i32
    %c0_i32_1 = arith.constant 0 : i32
    return %c0_i32, %c0_i32_0 : i32, i32
  }
  func.func @transform_3(%arg0: i32) -> (i32, i32) {
    %c0_i32 = arith.constant 0 : i32
    %c0_i32_0 = arith.constant 0 : i32
    %c0_i32_1 = arith.constant 0 : i32
    return %c0_i32, %c0_i32_0 : i32, i32
  }
  func.func @transform_4(%arg0: i32) -> (i32, i32) {
    %c0_i32 = arith.constant 0 : i32
    %c0_i32_0 = arith.constant 0 : i32
    return %arg0, %c0_i32 : i32, i32
  }
  func.func @transform_5(%arg0: i32) -> (i32, i32, i32) {
    %c0_i32 = arith.constant 0 : i32
    %c0_i32_0 = arith.constant 0 : i32
    %c0_i32_1 = arith.constant 0 : i32
    return %arg0, %c0_i32, %c0_i32_0 : i32, i32, i32
  }
  func.func @transform_6(%arg0: i32) -> (i32, i32, i32) {
    %c0_i32 = arith.constant 0 : i32
    %c0_i32_0 = arith.constant 0 : i32
    %c0_i32_1 = arith.constant 0 : i32
    return %arg0, %c0_i32, %c0_i32_0 : i32, i32, i32
  }
}

module attributes {stable_mosaic.version = 11 : i64} {
  func.func @_stage3_kernel(%arg0: i32, %arg1: memref<64x128xf32, #tpu.memory_space<vmem>>, %arg2: memref<64x128xf32, #tpu.memory_space<vmem>>, %arg3: memref<1x128xf32, #tpu.memory_space<vmem>>, %arg4: memref<1x128xf32, #tpu.memory_space<vmem>>, %arg5: memref<64x128xf32, #tpu.memory_space<vmem>>) attributes {dimension_semantics = [#tpu.dimension_semantics<parallel>], iteration_bounds = array<i64: 1>, scalar_prefetch = 0 : i64, scratch_operands = 0 : i64, tpu.core_type = #tpu.core_type<tc>, window_params = [{transform_indices = @transform_0, window_bounds = array<i64: 64, 128>}, {transform_indices = @transform_1, window_bounds = array<i64: 64, 128>}, {pipeline_mode = #tpu.pipeline_mode<synchronous>, transform_indices = @transform_2, window_bounds = array<i64: 1, 128>}, {pipeline_mode = #tpu.pipeline_mode<synchronous>, transform_indices = @transform_3, window_bounds = array<i64: 1, 128>}, {transform_indices = @transform_4, window_bounds = array<i64: 64, 128>}]} {
    %c0 = arith.constant 0 : index
    %c0_0 = arith.constant 0 : index
    %0 = vector.load %arg1[%c0, %c0_0] : memref<64x128xf32, #tpu.memory_space<vmem>>, vector<64x128xf32>
    %c0_1 = arith.constant 0 : index
    %c0_2 = arith.constant 0 : index
    %1 = vector.load %arg3[%c0_1, %c0_2] : memref<1x128xf32, #tpu.memory_space<vmem>>, vector<1x128xf32>
    %2 = vector.broadcast %1 : vector<1x128xf32> to vector<64x128xf32>
    %3 = arith.mulf %0, %2 : vector<64x128xf32>
    %c0_3 = arith.constant 0 : index
    %c0_4 = arith.constant 0 : index
    %4 = vector.load %arg4[%c0_3, %c0_4] : memref<1x128xf32, #tpu.memory_space<vmem>>, vector<1x128xf32>
    %5 = vector.broadcast %4 : vector<1x128xf32> to vector<64x128xf32>
    %6 = arith.addf %3, %5 : vector<64x128xf32>
    %c0_5 = arith.constant 0 : index
    %c0_6 = arith.constant 0 : index
    %7 = vector.load %arg2[%c0_5, %c0_6] : memref<64x128xf32, #tpu.memory_space<vmem>>, vector<64x128xf32>
    %8 = arith.addf %6, %7 : vector<64x128xf32>
    %cst = arith.constant 0.000000e+00 : f32
    %9 = vector.broadcast %cst : f32 to vector<64x128xf32>
    %10 = arith.maximumf %8, %9 : vector<64x128xf32>
    %c0_7 = arith.constant 0 : index
    %c0_8 = arith.constant 0 : index
    %11 = vector.load %arg5[%c0_7, %c0_8] : memref<64x128xf32, #tpu.memory_space<vmem>>, vector<64x128xf32>
    tpu.vector_store %arg5[%c0_7, %c0_8], %10 {strides = array<i32>} : memref<64x128xf32, #tpu.memory_space<vmem>>, vector<64x128xf32>,
    return
  }
  func.func @transform_0(%arg0: i32) -> (i32, i32) {
    %c0_i32 = arith.constant 0 : i32
    %c0_i32_0 = arith.constant 0 : i32
    return %arg0, %c0_i32 : i32, i32
  }
  func.func @transform_1(%arg0: i32) -> (i32, i32) {
    %c0_i32 = arith.constant 0 : i32
    %c0_i32_0 = arith.constant 0 : i32
    return %arg0, %c0_i32 : i32, i32
  }
  func.func @transform_2(%arg0: i32) -> (i32, i32) {
    %c0_i32 = arith.constant 0 : i32
    %c0_i32_0 = arith.constant 0 : i32
    %c0_i32_1 = arith.constant 0 : i32
    return %c0_i32, %c0_i32_0 : i32, i32
  }
  func.func @transform_3(%arg0: i32) -> (i32, i32) {
    %c0_i32 = arith.constant 0 : i32
    %c0_i32_0 = arith.constant 0 : i32
    %c0_i32_1 = arith.constant 0 : i32
    return %c0_i32, %c0_i32_0 : i32, i32
  }
  func.func @transform_4(%arg0: i32) -> (i32, i32) {
    %c0_i32 = arith.constant 0 : i32
    %c0_i32_0 = arith.constant 0 : i32
    return %arg0, %c0_i32 : i32, i32
  }
}

</mosaic_0001>

<llo_original>
// kernel: res_block_up_flat.5
$region0: #{res_block_up_flat.5}
  #allocation0 [shape = 'u32[]', space=smem, size = 0x4, offset = 0x4, fixed_abs, tag = 'smem constant byte address 0x4 - core index']
  #allocation1 [shape = 'u32[144,128]{1,0:T(1,128)}', space=vmem, size = 0x12000, scoped, tag = 'internal scratch']
  %s0 = inlined_call_operand.vmem [shape: f32[64,128], index: 0, kind: input, shape index: {}]
  %s1 = inlined_call_operand.vmem [shape: f32[64,128], index: 1, kind: input, shape index: {}]
  %s2 = inlined_call_operand.vmem [shape: f32[1,128], index: 2, kind: input, shape index: {}]
  %s3 = inlined_call_operand.vmem [shape: f32[1,128], index: 3, kind: input, shape index: {}]
  %s4 = inlined_call_operand.vmem [shape: f32[64,128], index: 4, kind: output, shape index: {}]
  %s5 = sld [smem:[#allocation0]]
  $region26: #{res_block_up_flat.5} parent=0
    _
  %s7 = ssub.s32 1, %s5
  %s8 = scalar_select 0, %s7, %s5
  // Predicated region
  $region2: #{res_block_up_flat.5} parent=0 // pred_check
    _
  $region3: #{res_block_up_flat.5} parent=0 // pred_check_branch
    %10 = sbr.rel (0) target = $region5
  $region4: #{res_block_up_flat.5} parent=0 // pred_region
    _
  $region5: #{res_block_up_flat.5} parent=0 // pred_fallthru
    _
  // Predicated region
  $region6: #{res_block_up_flat.5} parent=0 // pred_check
    _
  $region7: #{res_block_up_flat.5} parent=0 // pred_check_branch
    %12 = sbr.rel (0) target = $region9
  $region8: #{res_block_up_flat.5} parent=0 // pred_region
    _
  $region9: #{res_block_up_flat.5} parent=0 // pred_fallthru
    _
  // Predicated region
  $region10: #{res_block_up_flat.5} parent=0 // pred_check
    _
  $region11: #{res_block_up_flat.5} parent=0 // pred_check_branch
    %14 = sbr.rel (0) target = $region13
  $region12: #{res_block_up_flat.5} parent=0 // pred_region
    _
  $region13: #{res_block_up_flat.5} parent=0 // pred_fallthru
    _
  // Predicated region
  $region14: #{res_block_up_flat.5} parent=0 // pred_check
    _
  $region15: #{res_block_up_flat.5} parent=0 // pred_check_branch
    %16 = sbr.rel (0) target = $region17
  $region16: #{res_block_up_flat.5} parent=0 // pred_region
    _
  $region17: #{res_block_up_flat.5} parent=0 // pred_fallthru
    _
  %v17 = vld [vmem:[%s0] sm:$0xff]
  %v18 = vld [vmem:[%s0 + $0x8] sm:$0xff]
  %v19 = vld [vmem:[%s0 + $0x10] sm:$0xff]
  %v20 = vld [vmem:[%s0 + $0x18] sm:$0xff]
  %v21 = vld [vmem:[%s0 + $0x20] sm:$0xff]
  %v22 = vld [vmem:[%s0 + $0x28] sm:$0xff]
  %v23 = vld [vmem:[%s0 + $0x30] sm:$0xff]
  %v24 = vld [vmem:[%s0 + $0x38] sm:$0xff]
  %v25 = vld [vmem:[%s2] sm:$0x1]
  %v27 = vlaneseq
  %v28 = vshrl.u32 %v27, 7
  %v29 = vsub.s32 0, %v28
  %v30 = vrot.slane %v25, %v29
  %v32 = vmul.f32 %v17, %v30
  %v33 = vmul.f32 %v18, %v30
  %v34 = vmul.f32 %v19, %v30
  %v35 = vmul.f32 %v20, %v30
  %v36 = vmul.f32 %v21, %v30
  %v37 = vmul.f32 %v22, %v30
  %v38 = vmul.f32 %v23, %v30
  %v39 = vmul.f32 %v24, %v30
  %v40 = vld [vmem:[%s3] sm:$0x1]
  %v42 = vlaneseq
  %v43 = vshrl.u32 %v42, 7
  %v44 = vsub.s32 0, %v43
  %v45 = vrot.slane %v40, %v44
  %v47 = vadd.f32 %v32, %v45
  %v48 = vadd.f32 %v33, %v45
  %v49 = vadd.f32 %v34, %v45
  %v50 = vadd.f32 %v35, %v45
  %v51 = vadd.f32 %v36, %v45
  %v52 = vadd.f32 %v37, %v45
  %v53 = vadd.f32 %v38, %v45
  %v54 = vadd.f32 %v39, %v45
  %v55 = vld [vmem:[%s1] sm:$0xff]
  %v56 = vld [vmem:[%s1 + $0x8] sm:$0xff]
  %v57 = vld [vmem:[%s1 + $0x10] sm:$0xff]
  %v58 = vld [vmem:[%s1 + $0x18] sm:$0xff]
  %v59 = vld [vmem:[%s1 + $0x20] sm:$0xff]
  %v60 = vld [vmem:[%s1 + $0x28] sm:$0xff]
  %v61 = vld [vmem:[%s1 + $0x30] sm:$0xff]
  %v62 = vld [vmem:[%s1 + $0x38] sm:$0xff]
  %v63 = vadd.f32 %v47, %v55
  %v64 = vadd.f32 %v48, %v56
  %v65 = vadd.f32 %v49, %v57
  %v66 = vadd.f32 %v50, %v58
  %v67 = vadd.f32 %v51, %v59
  %v68 = vadd.f32 %v52, %v60
  %v69 = vadd.f32 %v53, %v61
  %v70 = vadd.f32 %v54, %v62
  %v71 = vmax.f32 %v63, 0.0
  %v72 = vmax.f32 %v64, 0.0
  %v73 = vmax.f32 %v65, 0.0
  %v74 = vmax.f32 %v66, 0.0
  %v75 = vmax.f32 %v67, 0.0
  %v76 = vmax.f32 %v68, 0.0
  %v77 = vmax.f32 %v69, 0.0
  %v78 = vmax.f32 %v70, 0.0
  %79 = vst [vmem:[%s4] sm:$0xff] %v71
  %80 = vst [vmem:[%s4 + $0x8] sm:$0xff] %v72
  %81 = vst [vmem:[%s4 + $0x10] sm:$0xff] %v73
  %82 = vst [vmem:[%s4 + $0x18] sm:$0xff] %v74
  %83 = vst [vmem:[%s4 + $0x20] sm:$0xff] %v75
  %84 = vst [vmem:[%s4 + $0x28] sm:$0xff] %v76
  %85 = vst [vmem:[%s4 + $0x30] sm:$0xff] %v77
  %86 = vst [vmem:[%s4 + $0x38] sm:$0xff] %v78
  // Predicated region
  $region18: #{res_block_up_flat.5} parent=0 // pred_check
    _
  $region19: #{res_block_up_flat.5} parent=0 // pred_check_branch
    %88 = sbr.rel (0) target = $region21
  $region20: #{res_block_up_flat.5} parent=0 // pred_region
    _
  $region21: #{res_block_up_flat.5} parent=0 // pred_fallthru
    _
  // Predicated region
  $region22: #{res_block_up_flat.5} parent=0 // pred_check
    _
  $region23: #{res_block_up_flat.5} parent=0 // pred_check_branch
    %90 = sbr.rel (0) target = $region25
  $region24: #{res_block_up_flat.5} parent=0 // pred_region
    _
  $region25: #{res_block_up_flat.5} parent=0 // pred_fallthru
    _

// kernel: res_block_up_flat.3
$region0: #{res_block_up_flat.3}
  #allocation0 [shape = 'u32[]', space=smem, size = 0x4, offset = 0x4, fixed_abs, tag = 'smem constant byte address 0x4 - core index']
  #allocation1 [shape = 'u32[144,128]{1,0:T(1,128)}', space=vmem, size = 0x12000, scoped, tag = 'internal scratch']
  %s0 = inlined_call_operand.vmem [shape: f32[64,128], index: 0, kind: input, shape index: {}]
  %s1 = inlined_call_operand.vmem [shape: f32[128,256], index: 1, kind: input, shape index: {}]
  %s2 = inlined_call_operand.vmem [shape: f32[64,128], index: 2, kind: output, shape index: {0}]
  %s3 = inlined_call_operand.vmem [shape: f32[64,128], index: 3, kind: output, shape index: {1}]
  %s4 = inlined_call_operand.vmem [shape: f32[2,1,128], index: 4, kind: output, shape index: {2}]
  %s5 = inlined_call_operand.vmem [shape: f32[2,1,128], index: 5, kind: output, shape index: {3}]
  %6 = xla_tuple %s2, %s3, %s4, %s5
  %s7 = sld [smem:[#allocation0]]
  $region65: #{res_block_up_flat.3} parent=0
    _
  %s9 = ssub.s32 1, %s7
  %s10 = scalar_select 0, %s9, %s7
  loop: start=0, step=1, limit=4
  $region2: #{res_block_up_flat.3} parent=0 // loop_pre_header
    _
  $region3: #{res_block_up_flat.3} parent=0 // loop_header
    %s12 = sphi 0, %s16
    %p13 = scmp.ge.s32.totalorder %s12, 4
    %s22 = sphi 0, %s24
    %s25 = sphi 0, %s22
    %s26 = sphi 0, %s25
    %s42 = sphi 0, %s26
    %s46 = sphi 0, %s46
    %s48 = sphi 0, %s46
    %s49 = sphi 0, %s48
    %s63 = sphi 0, %s49
    %s69 = sphi 0, %s71
    %s72 = sphi 0, %s69
    %s73 = sphi 0, %s72
    %s89 = sphi 0, %s73
    %s95 = sphi 0, %s97
    %s98 = sphi 0, %s95
    %s99 = sphi 0, %s98
    %s115 = sphi 0, %s99
    %s121 = sphi 0, %s123
    %s124 = sphi 0, %s121
    %s125 = sphi 0, %s124
    %s141 = sphi 0, %s125
    %s147 = sphi 0, %s149
    %s150 = sphi 0, %s147
    %s151 = sphi 0, %s150
    %s167 = sphi 0, %s151
  $region4: #{res_block_up_flat.3} parent=0 // loop_header_branch
    %15 = sbr.rel (%p13) target = $region8
  $region5: #{res_block_up_flat.3} parent=0 // loop_body
    %s17 = ssub.s32 %s12, 1
    %s18 = ssub.s32 %s12, 2
    %s19 = sadd.s32 %s12, 1
    %s20 = ssub.s32 %s12, %s19
    %p21 = scmp.eq.s32.totalorder %s20, 0
    %s23 = sadd.s32 %s22, 1
    %s24 = scalar_select %p21, %s22, %s23
    %p27 = pneg %p21
    %p28 = scmp.eq.s32.totalorder %s12, 1
    %p29 = por %p27, %p28
    %p30 = scmp.ne.s32.totalorder %s22, %s25
    %p31 = scmp.eq.s32.totalorder %s12, 0
    %p32 = por %p30, %p31
    %p33 = scmp.ne.s32.totalorder %s22, %s25
    %p34 = scmp.eq.s32.totalorder %s17, 1
    %p35 = por %p33, %p34
    %p36 = scmp.ne.s32.totalorder %s25, %s26
    %p37 = scmp.eq.s32.totalorder %s17, 0
    %p38 = por %p36, %p37
    %p39 = scmp.ne.s32.totalorder %s25, %s26
    %p40 = scmp.eq.s32.totalorder %s18, 1
    %p41 = por %p39, %p40
    %p43 = scmp.ne.s32.totalorder %s26, %s42
    %p44 = scmp.eq.s32.totalorder %s18, 0
    %p45 = por %p43, %p44
    %s47 = sadd.s32 %s46, 1
    %p50 = scmp.eq.s32.totalorder %s12, 1
    %p51 = scmp.ne.s32.totalorder %s46, %s48
    %p52 = scmp.eq.s32.totalorder %s12, 0
    %p53 = por %p51, %p52
    %p54 = scmp.ne.s32.totalorder %s46, %s48
    %p55 = scmp.eq.s32.totalorder %s17, 1
    %p56 = por %p54, %p55
    %p57 = scmp.ne.s32.totalorder %s48, %s49
    %p58 = scmp.eq.s32.totalorder %s17, 0
    %p59 = por %p57, %p58
    %p60 = scmp.ne.s32.totalorder %s48, %s49
    %p61 = scmp.eq.s32.totalorder %s18, 1
    %p62 = por %p60, %p61
    %p64 = scmp.ne.s32.totalorder %s49, %s63
    %p65 = scmp.eq.s32.totalorder %s18, 0
    %p66 = por %p64, %p65
    %s67 = ssub.s32 %s12, %s19
    %p68 = scmp.eq.s32.totalorder %s67, 0
    %s70 = sadd.s32 %s69, 1
    %s71 = scalar_select %p68, %s69, %s70
    %p74 = pneg %p68
    %p75 = scmp.eq.s32.totalorder %s12, 1
    %p76 = por %p74, %p75
    %p77 = scmp.ne.s32.totalorder %s69, %s72
    %p78 = scmp.eq.s32.totalorder %s12, 0
    %p79 = por %p77, %p78
    %p80 = scmp.ne.s32.totalorder %s69, %s72
    %p81 = scmp.eq.s32.totalorder %s17, 1
    %p82 = por %p80, %p81
    %p83 = scmp.ne.s32.totalorder %s72, %s73
    %p84 = scmp.eq.s32.totalorder %s17, 0
    %p85 = por %p83, %p84
    %p86 = scmp.ne.s32.totalorder %s72, %s73
    %p87 = scmp.eq.s32.totalorder %s18, 1
    %p88 = por %p86, %p87
    %p90 = scmp.ne.s32.totalorder %s73, %s89
    %p91 = scmp.eq.s32.totalorder %s18, 0
    %p92 = por %p90, %p91
    %s93 = ssub.s32 %s12, %s19
    %p94 = scmp.eq.s32.totalorder %s93, 0
    %s96 = sadd.s32 %s95, 1
    %s97 = scalar_select %p94, %s95, %s96
    %p100 = pneg %p94
    %p101 = scmp.eq.s32.totalorder %s12, 1
    %p102 = por %p100, %p101
    %p103 = scmp.ne.s32.totalorder %s95, %s98
    %p104 = scmp.eq.s32.totalorder %s12, 0
    %p105 = por %p103, %p104
    %p106 = scmp.ne.s32.totalorder %s95, %s98
    %p107 = scmp.eq.s32.totalorder %s17, 1
    %p108 = por %p106, %p107
    %p109 = scmp.ne.s32.totalorder %s98, %s99
    %p110 = scmp.eq.s32.totalorder %s17, 0
    %p111 = por %p109, %p110
    %p112 = scmp.ne.s32.totalorder %s98, %s99
    %p113 = scmp.eq.s32.totalorder %s18, 1
    %p114 = por %p112, %p113
    %p116 = scmp.ne.s32.totalorder %s99, %s115
    %p117 = scmp.eq.s32.totalorder %s18, 0
    %p118 = por %p116, %p117
    %s119 = ssub.s32 %s12, %s19
    %p120 = scmp.eq.s32.totalorder %s119, 0
    %s122 = sadd.s32 %s121, 1
    %s123 = scalar_select %p120, %s121, %s122
    %p126 = pneg %p120
    %p127 = scmp.eq.s32.totalorder %s12, 1
    %p128 = por %p126, %p127
    %p129 = scmp.ne.s32.totalorder %s121, %s124
    %p130 = scmp.eq.s32.totalorder %s12, 0
    %p131 = por %p129, %p130
    %p132 = scmp.ne.s32.totalorder %s121, %s124
    %p133 = scmp.eq.s32.totalorder %s17, 1
    %p134 = por %p132, %p133
    %p135 = scmp.ne.s32.totalorder %s124, %s125
    %p136 = scmp.eq.s32.totalorder %s17, 0
    %p137 = por %p135, %p136
    %p138 = scmp.ne.s32.totalorder %s124, %s125
    %p139 = scmp.eq.s32.totalorder %s18, 1
    %p140 = por %p138, %p139
    %p142 = scmp.ne.s32.totalorder %s125, %s141
    %p143 = scmp.eq.s32.totalorder %s18, 0
    %p144 = por %p142, %p143
    %s145 = ssub.s32 %s12, %s19
    %p146 = scmp.eq.s32.totalorder %s145, 0
    %s148 = sadd.s32 %s147, 1
    %s149 = scalar_select %p146, %s147, %s148
    %p152 = pneg %p146
    %p153 = scmp.eq.s32.totalorder %s12, 1
    %p154 = por %p152, %p153
    %p155 = scmp.ne.s32.totalorder %s147, %s150
    %p156 = scmp.eq.s32.totalorder %s12, 0
    %p157 = por %p155, %p156
    %p158 = scmp.ne.s32.totalorder %s147, %s150
    %p159 = scmp.eq.s32.totalorder %s17, 1
    %p160 = por %p158, %p159
    %p161 = scmp.ne.s32.totalorder %s150, %s151
    %p162 = scmp.eq.s32.totalorder %s17, 0
    %p163 = por %p161, %p162
    %p164 = scmp.ne.s32.totalorder %s150, %s151
    %p165 = scmp.eq.s32.totalorder %s18, 1
    %p166 = por %p164, %p165
    %p168 = scmp.ne.s32.totalorder %s151, %s167
    %p169 = scmp.eq.s32.totalorder %s18, 0
    %p170 = por %p168, %p169
    %p171 = scmp.le.s32.totalorder 1, %s12
    %p172 = scmp.lt.s32.totalorder %s12, 3
    %p173 = pnand %p171, %p172
    %p174 = pneg %p173
    // Predicated region
    $region9: #{res_block_up_flat.3} parent=5 // pred_check
      _
    $region10: #{res_block_up_flat.3} parent=5 // pred_check_branch
      %176 = sbr.rel (%p173) target = $region12
    $region11: #{res_block_up_flat.3} parent=5 // pred_region
      %s177 = ssub.s32 %s12, 1
      // Predicated region
      $region13: #{res_block_up_flat.3} parent=11 // pred_check
        %p178 = pneg %p59
      $region14: #{res_block_up_flat.3} parent=11 // pred_check_branch
        %180 = sbr.rel (%p178) target = $region16
      $region15: #{res_block_up_flat.3} parent=11 // pred_region
        _
      $region16: #{res_block_up_flat.3} parent=11 // pred_fallthru
        _
    $region12: #{res_block_up_flat.3} parent=5 // pred_fallthru
      _
    %p181 = scmp.lt.s32.totalorder %s12, 2
    // Predicated region
    $region17: #{res_block_up_flat.3} parent=5 // pred_check
      %p182 = pneg %p181
    $region18: #{res_block_up_flat.3} parent=5 // pred_check_branch
      %184 = sbr.rel (%p182) target = $region20
    $region19: #{res_block_up_flat.3} parent=5 // pred_region
      // Predicated region
      $region21: #{res_block_up_flat.3} parent=19 // pred_check
        %p185 = pneg %p32
      $region22: #{res_block_up_flat.3} parent=19 // pred_check_branch
        %187 = sbr.rel (%p185) target = $region24
      $region23: #{res_block_up_flat.3} parent=19 // pred_region
        %s188 = smul.u32 4, %s12
        %p189 = scmp.lt.s32.totalorder %s188, 7
        %s190 = scalar_select %p189, %s188, 7
        %s191 = smul.addr %s190, 8
        %s192 = scalar_lea.vmem %s0, %s191
        %s193 = smul.u32 4, %s12
      $region24: #{res_block_up_flat.3} parent=19 // pred_fallthru
        _
    $region20: #{res_block_up_flat.3} parent=5 // pred_fallthru
      _
    %p194 = scmp.le.s32.totalorder 1, %s12
    %p195 = scmp.lt.s32.totalorder %s12, 3
    %p196 = pnand %p194, %p195
    %p197 = pneg %p196
    // Predicated region
    $region25: #{res_block_up_flat.3} parent=5 // pred_check
      _
    $region26: #{res_block_up_flat.3} parent=5 // pred_check_branch
      %199 = sbr.rel (%p196) target = $region28
    $region27: #{res_block_up_flat.3} parent=5 // pred_region
      %s200 = ssub.s32 %s12, 1
      %s201 = smul.u32 4, %s17
      %p202 = scmp.lt.s32.totalorder %s201, 7
      %s203 = scalar_select %p202, %s201, 7
      %s204 = smul.addr %s203, 8
      %s205 = scalar_lea.vmem %s0, %s204
      %p206 = pneg %p38
      %p207 = pneg %p35
      %p208 = pneg %p59
      %p209 = pneg %p56
      %p210 = pneg %p85
      %p211 = pneg %p82
      %s212 = smul.u32 4, %s17
      %p213 = scmp.lt.s32.totalorder %s212, 7
      %s214 = scalar_select %p213, %s212, 7
      %s215 = smul.addr %s214, 8
      %s216 = scalar_lea.vmem %s2, %s215
      %p217 = pneg %p111
      %p218 = pneg %p108
      %s219 = smul.u32 4, %s17
      %p220 = scmp.lt.s32.totalorder %s219, 7
      %s221 = scalar_select %p220, %s219, 7
      %s222 = smul.addr %s221, 8
      %s223 = scalar_lea.vmem %s3, %s222
      %p224 = pneg %p137
      %p225 = pneg %p134
      %p226 = scmp.lt.s32.totalorder %s17, 1
      %s227 = scalar_select %p226, %s17, 1
      %s228 = scalar_lea.vmem %s4, %s227
      %p229 = pneg %p163
      %p230 = pneg %p160
      %p231 = scmp.lt.s32.totalorder %s17, 1
      %s232 = scalar_select %p231, %s17, 1
      %s233 = scalar_lea.vmem %s5, %s232
      %s234 = smul.u32 4, %s17
      %p235 = scmp.lt.s32.totalorder %s234, 7
      %s236 = scalar_select %p235, %s234, 7
      %s237 = smul.addr %s236, 8
      %s238 = scalar_lea.vmem %s0, %s237
      %s239 = smul.u32 4, %s17
      %s240 = smul.u32 4, %s17
      %p241 = scmp.lt.s32.totalorder %s240, 7
      %s242 = scalar_select %p241, %s240, 7
      %s243 = smul.addr %s242, 8
      %s244 = scalar_lea.vmem %s2, %s243
      %s245 = smul.u32 4, %s17
      %s246 = smul.u32 4, %s17
      %p247 = scmp.lt.s32.totalorder %s246, 7
      %s248 = scalar_select %p247, %s246, 7
      %s249 = smul.addr %s248, 8
      %s250 = scalar_lea.vmem %s3, %s249
      %s251 = smul.u32 4, %s17
      %p252 = scmp.lt.s32.totalorder %s17, 1
      %s253 = scalar_select %p252, %s17, 1
      %s254 = scalar_lea.vmem %s4, %s253
      %p255 = scmp.lt.s32.totalorder %s17, 1
      %s256 = scalar_select %p255, %s17, 1
      %s257 = scalar_lea.vmem %s5, %s256
      %v258 = vld [vmem:[%s238] sm:$0xff]
      %v259 = vld [vmem:[%s238 + $0x8] sm:$0xff]
      %v260 = vld [vmem:[%s238 + $0x10] sm:$0xff]
      %v261 = vld [vmem:[%s238 + $0x18] sm:$0xff]
      %v262 = vld [vmem:[%s1] sm:$0xff]
      %v263 = vld [vmem:[%s1 + $0x8] sm:$0xff]
      %v264 = vld [vmem:[%s1 + $0x10] sm:$0xff]
      %v265 = vld [vmem:[%s1 + $0x18] sm:$0xff]
      %v266 = vld [vmem:[%s1 + $0x20] sm:$0xff]
      %v267 = vld [vmem:[%s1 + $0x28] sm:$0xff]
      %v268 = vld [vmem:[%s1 + $0x30] sm:$0xff]
      %v269 = vld [vmem:[%s1 + $0x38] sm:$0xff]
      %v270 = vld [vmem:[%s1 + $0x40] sm:$0xff]
      %v271 = vld [vmem:[%s1 + $0x48] sm:$0xff]
      %v272 = vld [vmem:[%s1 + $0x50] sm:$0xff]
      %v273 = vld [vmem:[%s1 + $0x58] sm:$0xff]
      %v274 = vld [vmem:[%s1 + $0x60] sm:$0xff]
      %v275 = vld [vmem:[%s1 + $0x68] sm:$0xff]
      %v276 = vld [vmem:[%s1 + $0x70] sm:$0xff]
      %v277 = vld [vmem:[%s1 + $0x78] sm:$0xff]
      %v278 = vld [vmem:[%s1 + $0x80] sm:$0xff]
      %v279 = vld [vmem:[%s1 + $0x88] sm:$0xff]
      %v280 = vld [vmem:[%s1 + $0x90] sm:$0xff]
      %v281 = vld [vmem:[%s1 + $0x98] sm:$0xff]
      %v282 = vld [vmem:[%s1 + $0xa0] sm:$0xff]
      %v283 = vld [vmem:[%s1 + $0xa8] sm:$0xff]
      %v284 = vld [vmem:[%s1 + $0xb0] sm:$0xff]
      %v285 = vld [vmem:[%s1 + $0xb8] sm:$0xff]
      %v286 = vld [vmem:[%s1 + $0xc0] sm:$0xff]
      %v287 = vld [vmem:[%s1 + $0xc8] sm:$0xff]
      %v288 = vld [vmem:[%s1 + $0xd0] sm:$0xff]
      %v289 = vld [vmem:[%s1 + $0xd8] sm:$0xff]
      %v290 = vld [vmem:[%s1 + $0xe0] sm:$0xff]
      %v291 = vld [vmem:[%s1 + $0xe8] sm:$0xff]
      %v292 = vld [vmem:[%s1 + $0xf0] sm:$0xff]
      %v293 = vld [vmem:[%s1 + $0xf8] sm:$0xff]
      %294 = vmatprep.subr.mxu0 %v263
      %295 = vmatpush1.msra.mxu0 %v262
      %296 = vmatprep.subr.mxu0 %v265
      %297 = vmatpush1.msra.mxu0 %v264
      %298 = vmatprep.subr.mxu0 %v267
      %299 = vmatpush1.msra.mxu0 %v266
      %300 = vmatprep.subr.mxu0 %v269
      %301 = vmatpush1.msra.mxu0 %v268
      %302 = vmatprep.subr.mxu0 %v271
      %303 = vmatpush1.msra.mxu0 %v270
      %304 = vmatprep.subr.mxu0 %v273
      %305 = vmatpush1.msra.mxu0 %v272
      %306 = vmatprep.subr.mxu0 %v275
      %307 = vmatpush1.msra.mxu0 %v274
      %308 = vmatprep.subr.mxu0 %v277
      %309 = vmatpush1.msra.mxu0 %v276
      %310 = vmatprep.subr.mxu0 %v279
      %311 = vmatpush1.msra.mxu0 %v278
      %312 = vmatprep.subr.mxu0 %v281
      %313 = vmatpush1.msra.mxu0 %v280
      %314 = vmatprep.subr.mxu0 %v283
      %315 = vmatpush1.msra.mxu0 %v282
      %316 = vmatprep.subr.mxu0 %v285
      %317 = vmatpush1.msra.mxu0 %v284
      %318 = vmatprep.subr.mxu0 %v287
      %319 = vmatpush1.msra.mxu0 %v286
      %320 = vmatprep.subr.mxu0 %v289
      %321 = vmatpush1.msra.mxu0 %v288
      %322 = vmatprep.subr.mxu0 %v291
      %323 = vmatpush1.msra.mxu0 %v290
      %324 = vmatprep.subr.mxu0 %v293
      %325 = vmatpush1.msra.mxu0 %v292
      %326 = vmatprep.subr.mxu0 0.0
      %327 = vmatpush1.msra.mxu0 0.0
      %328 = vmatprep.subr.mxu0 0.0
      %329 = vmatpush1.msra.mxu0 0.0
      %330 = vmatprep.subr.mxu0 0.0
      %331 = vmatpush1.msra.mxu0 0.0
      %332 = vmatprep.subr.mxu0 0.0
      %333 = vmatpush1.msra.mxu0 0.0
      %334 = vmatprep.subr.mxu0 0.0
      %335 = vmatpush1.msra.mxu0 0.0
      %336 = vmatprep.subr.mxu0 0.0
      %337 = vmatpush1.msra.mxu0 0.0
      %338 = vmatprep.subr.mxu0 0.0
      %339 = vmatpush1.msra.mxu0 0.0
      %340 = vmatprep.subr.mxu0 0.0
      %341 = vmatpush1.msra.mxu0 0.0
      %342 = vmatprep.subr.mxu0 0.0
      %343 = vmatpush1.msra.mxu0 0.0
      %344 = vmatprep.subr.mxu0 0.0
      %345 = vmatpush1.msra.mxu0 0.0
      %346 = vmatprep.subr.mxu0 0.0
      %347 = vmatpush1.msra.mxu0 0.0
      %348 = vmatprep.subr.mxu0 0.0
      %349 = vmatpush1.msra.mxu0 0.0
      %350 = vmatprep.subr.mxu0 0.0
      %351 = vmatpush1.msra.mxu0 0.0
      %352 = vmatprep.subr.mxu0 0.0
      %353 = vmatpush1.msra.mxu0 0.0
      %354 = vmatprep.subr.mxu0 0.0
      %355 = vmatpush1.msra.mxu0 0.0
      %356 = vmatprep.subr.mxu0 0.0
      %357 = vmatpush1.msra.mxu0 0.0
      %358 = vmatprep.mubr.f32.mxu0 0.0
      %359 = vmatmul.mubr.f32.gmra.mrb[0].mxu0 %v258
      %v360 = vpop.f32.mrb[0].mxu0
      %v361 = vadd.f32 0.0, %v360
      %v362 = vpop.f32.mrb[0].mxu0
      %v363 = vadd.f32 0.0, %v362
      %364 = vmatprep.mubr.f32.mxu0 0.0
      %365 = vmatmul.mubr.f32.gmra.mrb[0].mxu0 %v259
      %v366 = vpop.f32.mrb[0].mxu0
      %v367 = vadd.f32 0.0, %v366
      %v368 = vpop.f32.mrb[0].mxu0
      %v369 = vadd.f32 0.0, %v368
      %370 = vmatprep.mubr.f32.mxu0 0.0
      %371 = vmatmul.mubr.f32.gmra.mrb[0].mxu0 %v260
      %v372 = vpop.f32.mrb[0].mxu0
      %v373 = vadd.f32 0.0, %v372
      %v374 = vpop.f32.mrb[0].mxu0
      %v375 = vadd.f32 0.0, %v374
      %376 = vmatprep.mubr.f32.mxu0 0.0
      %377 = vmatmul.mubr.f32.gmra.mrb[0].mxu0 %v261
      %v378 = vpop.f32.mrb[0].mxu0
      %v379 = vadd.f32 0.0, %v378
      %v380 = vpop.f32.mrb[0].mxu0
      %v381 = vadd.f32 0.0, %v380
      %382 = vdwg.mxu0
      %383 = vst [vmem:[%s244] sm:$0xff] %v361
      %384 = vst [vmem:[%s244 + $0x8] sm:$0xff] %v367
      %385 = vst [vmem:[%s244 + $0x10] sm:$0xff] %v373
      %386 = vst [vmem:[%s244 + $0x18] sm:$0xff] %v379
      %387 = vst [vmem:[%s250] sm:$0xff] %v363
      %388 = vst [vmem:[%s250 + $0x8] sm:$0xff] %v369
      %389 = vst [vmem:[%s250 + $0x10] sm:$0xff] %v375
      %390 = vst [vmem:[%s250 + $0x18] sm:$0xff] %v381
      %v391 = vadd.f32 %v363, %v369
      %v392 = vadd.f32 %v391, %v375
      %v393 = vadd.f32 %v392, %v381
      %v394 = vrot.slane %v393, 4
      %v395 = vadd.f32 %v393, %v394
      %v396 = vrot.slane %v395, 2
      %v397 = vadd.f32 %v395, %v396
      %v398 = vrot.slane %v397, 1
      %v399 = vadd.f32 %v397, %v398
      %400 = vst [vmem:[%s254] sm:$0x1] %v399
      %v401 = vmul.f32 %v363, %v363
      %v402 = vmul.f32 %v369, %v369
      %v403 = vmul.f32 %v375, %v375
      %v404 = vmul.f32 %v381, %v381
      %v405 = vadd.f32 %v401, %v402
      %v406 = vadd.f32 %v405, %v403
      %v407 = vadd.f32 %v406, %v404
      %v408 = vrot.slane %v407, 4
      %v409 = vadd.f32 %v407, %v408
      %v410 = vrot.slane %v409, 2
      %v411 = vadd.f32 %v409, %v410
      %v412 = vrot.slane %v411, 1
      %v413 = vadd.f32 %v411, %v412
      %414 = vst [vmem:[%s257] sm:$0x1] %v413
      %s415 = smul.u32 4, %s17
      %p416 = scmp.lt.s32.totalorder %s415, 7
      %s417 = scalar_select %p416, %s415, 7
      %s418 = smul.addr %s417, 8
      %s419 = scalar_lea.vmem %s2, %s418
      %s420 = smul.u32 4, %s17
      %p421 = scmp.lt.s32.totalorder %s420, 7
      %s422 = scalar_select %p421, %s420, 7
      %s423 = smul.addr %s422, 8
      %s424 = scalar_lea.vmem %s3, %s423
      %p425 = scmp.lt.s32.totalorder %s17, 1
      %s426 = scalar_select %p425, %s17, 1
      %s427 = scalar_lea.vmem %s4, %s426
      %p428 = scmp.lt.s32.totalorder %s17, 1
      %s429 = scalar_select %p428, %s17, 1
      %s430 = scalar_lea.vmem %s5, %s429
      // Predicated region
      $region29: #{res_block_up_flat.3} parent=27 // pred_check
        %p431 = pneg %p82
      $region30: #{res_block_up_flat.3} parent=27 // pred_check_branch
        %433 = sbr.rel (%p431) target = $region32
      $region31: #{res_block_up_flat.3} parent=27 // pred_region
        %s434 = smul.u32 4, %s17
      $region32: #{res_block_up_flat.3} parent=27 // pred_fallthru
        _
      // Predicated region
      $region33: #{res_block_up_flat.3} parent=27 // pred_check
        %p435 = pneg %p108
      $region34: #{res_block_up_flat.3} parent=27 // pred_check_branch
        %437 = sbr.rel (%p435) target = $region36
      $region35: #{res_block_up_flat.3} parent=27 // pred_region
        %s438 = smul.u32 4, %s17
      $region36: #{res_block_up_flat.3} parent=27 // pred_fallthru
        _
      // Predicated region
      $region37: #{res_block_up_flat.3} parent=27 // pred_check
        %p439 = pneg %p134
      $region38: #{res_block_up_flat.3} parent=27 // pred_check_branch
        %441 = sbr.rel (%p439) target = $region40
      $region39: #{res_block_up_flat.3} parent=27 // pred_region
        _
      $region40: #{res_block_up_flat.3} parent=27 // pred_fallthru
        _
      // Predicated region
      $region41: #{res_block_up_flat.3} parent=27 // pred_check
        %p442 = pneg %p160
      $region42: #{res_block_up_flat.3} parent=27 // pred_check_branch
        %444 = sbr.rel (%p442) target = $region44
      $region43: #{res_block_up_flat.3} parent=27 // pred_region
        _
      $region44: #{res_block_up_flat.3} parent=27 // pred_fallthru
        _
    $region28: #{res_block_up_flat.3} parent=5 // pred_fallthru
      _
    %p445 = scmp.le.s32.totalorder 2, %s12
    // Predicated region
    $region45: #{res_block_up_flat.3} parent=5 // pred_check
      %p446 = pneg %p445
    $region46: #{res_block_up_flat.3} parent=5 // pred_check_branch
      %448 = sbr.rel (%p446) target = $region48
    $region47: #{res_block_up_flat.3} parent=5 // pred_region
      %s449 = ssub.s32 %s12, 2
      // Predicated region
      $region49: #{res_block_up_flat.3} parent=47 // pred_check
        %p450 = pneg %p88
      $region50: #{res_block_up_flat.3} parent=47 // pred_check_branch
        %452 = sbr.rel (%p450) target = $region52
      $region51: #{res_block_up_flat.3} parent=47 // pred_region
        %s453 = smul.u32 4, %s18
        %p454 = scmp.lt.s32.totalorder %s453, 7
        %s455 = scalar_select %p454, %s453, 7
        %s456 = smul.addr %s455, 8
        %s457 = scalar_lea.vmem %s2, %s456
      $region52: #{res_block_up_flat.3} parent=47 // pred_fallthru
        _
      // Predicated region
      $region53: #{res_block_up_flat.3} parent=47 // pred_check
        %p458 = pneg %p114
      $region54: #{res_block_up_flat.3} parent=47 // pred_check_branch
        %460 = sbr.rel (%p458) target = $region56
      $region55: #{res_block_up_flat.3} parent=47 // pred_region
        %s461 = smul.u32 4, %s18
        %p462 = scmp.lt.s32.totalorder %s461, 7
        %s463 = scalar_select %p462, %s461, 7
        %s464 = smul.addr %s463, 8
        %s465 = scalar_lea.vmem %s3, %s464
      $region56: #{res_block_up_flat.3} parent=47 // pred_fallthru
        _
      // Predicated region
      $region57: #{res_block_up_flat.3} parent=47 // pred_check
        %p466 = pneg %p140
      $region58: #{res_block_up_flat.3} parent=47 // pred_check_branch
        %468 = sbr.rel (%p466) target = $region60
      $region59: #{res_block_up_flat.3} parent=47 // pred_region
        %p469 = scmp.lt.s32.totalorder %s18, 1
        %s470 = scalar_select %p469, %s18, 1
        %s471 = scalar_lea.vmem %s4, %s470
      $region60: #{res_block_up_flat.3} parent=47 // pred_fallthru
        _
      // Predicated region
      $region61: #{res_block_up_flat.3} parent=47 // pred_check
        %p472 = pneg %p166
      $region62: #{res_block_up_flat.3} parent=47 // pred_check_branch
        %474 = sbr.rel (%p472) target = $region64
      $region63: #{res_block_up_flat.3} parent=47 // pred_region
        %p475 = scmp.lt.s32.totalorder %s18, 1
        %s476 = scalar_select %p475, %s18, 1
        %s477 = scalar_lea.vmem %s5, %s476
      $region64: #{res_block_up_flat.3} parent=47 // pred_fallthru
        _
    $region48: #{res_block_up_flat.3} parent=5 // pred_fallthru
      _
  $region6: #{res_block_up_flat.3} parent=0 // loop_footer
    %s16 = sadd.s32 1, %s12
  $region7: #{res_block_up_flat.3} parent=0 // loop_footer_branch
    %11 = sbr.rel target = $region3
  $region8: #{res_block_up_flat.3} parent=0 // loop_exit
    _

// kernel: res_block_up_flat.4
$region0: #{res_block_up_flat.4}
  #allocation0 [shape = 'u32[]', space=smem, size = 0x4, offset = 0x4, fixed_abs, tag = 'smem constant byte address 0x4 - core index']
  #allocation1 [shape = 'u32[144,128]{1,0:T(1,128)}', space=vmem, size = 0x12000, scoped, tag = 'internal scratch']
  %s0 = inlined_call_operand.vmem [shape: f32[64,128], index: 0, kind: input, shape index: {}]
  %s1 = inlined_call_operand.vmem [shape: f32[1,128], index: 1, kind: input, shape index: {}]
  %s2 = inlined_call_operand.vmem [shape: f32[1,128], index: 2, kind: input, shape index: {}]
  %s3 = inlined_call_operand.vmem [shape: f32[128,128], index: 3, kind: input, shape index: {}]
  %s4 = inlined_call_operand.vmem [shape: f32[64,128], index: 4, kind: output, shape index: {0}]
  %s5 = inlined_call_operand.vmem [shape: f32[2,1,128], index: 5, kind: output, shape index: {1}]
  %s6 = inlined_call_operand.vmem [shape: f32[2,1,128], index: 6, kind: output, shape index: {2}]
  %7 = xla_tuple %s4, %s5, %s6
  %s8 = sld [smem:[#allocation0]]
  $region65: #{res_block_up_flat.4} parent=0
    _
  %s10 = ssub.s32 1, %s8
  %s11 = scalar_select 0, %s10, %s8
  loop: start=0, step=1, limit=4
  $region2: #{res_block_up_flat.4} parent=0 // loop_pre_header
    _
  $region3: #{res_block_up_flat.4} parent=0 // loop_header
    %s13 = sphi 0, %s17
    %p14 = scmp.ge.s32.totalorder %s13, 4
    %s23 = sphi 0, %s25
    %s26 = sphi 0, %s23
    %s27 = sphi 0, %s26
    %s43 = sphi 0, %s27
    %s47 = sphi 0, %s47
    %s49 = sphi 0, %s47
    %s50 = sphi 0, %s49
    %s64 = sphi 0, %s50
    %s68 = sphi 0, %s68
    %s70 = sphi 0, %s68
    %s71 = sphi 0, %s70
    %s85 = sphi 0, %s71
    %s89 = sphi 0, %s89
    %s91 = sphi 0, %s89
    %s92 = sphi 0, %s91
    %s106 = sphi 0, %s92
    %s112 = sphi 0, %s114
    %s115 = sphi 0, %s112
    %s116 = sphi 0, %s115
    %s132 = sphi 0, %s116
    %s138 = sphi 0, %s140
    %s141 = sphi 0, %s138
    %s142 = sphi 0, %s141
    %s158 = sphi 0, %s142
    %s164 = sphi 0, %s166
    %s167 = sphi 0, %s164
    %s168 = sphi 0, %s167
    %s184 = sphi 0, %s168
  $region4: #{res_block_up_flat.4} parent=0 // loop_header_branch
    %16 = sbr.rel (%p14) target = $region8
  $region5: #{res_block_up_flat.4} parent=0 // loop_body
    %s18 = ssub.s32 %s13, 1
    %s19 = ssub.s32 %s13, 2
    %s20 = sadd.s32 %s13, 1
    %s21 = ssub.s32 %s13, %s20
    %p22 = scmp.eq.s32.totalorder %s21, 0
    %s24 = sadd.s32 %s23, 1
    %s25 = scalar_select %p22, %s23, %s24
    %p28 = pneg %p22
    %p29 = scmp.eq.s32.totalorder %s13, 1
    %p30 = por %p28, %p29
    %p31 = scmp.ne.s32.totalorder %s23, %s26
    %p32 = scmp.eq.s32.totalorder %s13, 0
    %p33 = por %p31, %p32
    %p34 = scmp.ne.s32.totalorder %s23, %s26
    %p35 = scmp.eq.s32.totalorder %s18, 1
    %p36 = por %p34, %p35
    %p37 = scmp.ne.s32.totalorder %s26, %s27
    %p38 = scmp.eq.s32.totalorder %s18, 0
    %p39 = por %p37, %p38
    %p40 = scmp.ne.s32.totalorder %s26, %s27
    %p41 = scmp.eq.s32.totalorder %s19, 1
    %p42 = por %p40, %p41
    %p44 = scmp.ne.s32.totalorder %s27, %s43
    %p45 = scmp.eq.s32.totalorder %s19, 0
    %p46 = por %p44, %p45
    %s48 = sadd.s32 %s47, 1
    %p51 = scmp.eq.s32.totalorder %s13, 1
    %p52 = scmp.ne.s32.totalorder %s47, %s49
    %p53 = scmp.eq.s32.totalorder %s13, 0
    %p54 = por %p52, %p53
    %p55 = scmp.ne.s32.totalorder %s47, %s49
    %p56 = scmp.eq.s32.totalorder %s18, 1
    %p57 = por %p55, %p56
    %p58 = scmp.ne.s32.totalorder %s49, %s50
    %p59 = scmp.eq.s32.totalorder %s18, 0
    %p60 = por %p58, %p59
    %p61 = scmp.ne.s32.totalorder %s49, %s50
    %p62 = scmp.eq.s32.totalorder %s19, 1
    %p63 = por %p61, %p62
    %p65 = scmp.ne.s32.totalorder %s50, %s64
    %p66 = scmp.eq.s32.totalorder %s19, 0
    %p67 = por %p65, %p66
    %s69 = sadd.s32 %s68, 1
    %p72 = scmp.eq.s32.totalorder %s13, 1
    %p73 = scmp.ne.s32.totalorder %s68, %s70
    %p74 = scmp.eq.s32.totalorder %s13, 0
    %p75 = por %p73, %p74
    %p76 = scmp.ne.s32.totalorder %s68, %s70
    %p77 = scmp.eq.s32.totalorder %s18, 1
    %p78 = por %p76, %p77
    %p79 = scmp.ne.s32.totalorder %s70, %s71
    %p80 = scmp.eq.s32.totalorder %s18, 0
    %p81 = por %p79, %p80
    %p82 = scmp.ne.s32.totalorder %s70, %s71
    %p83 = scmp.eq.s32.totalorder %s19, 1
    %p84 = por %p82, %p83
    %p86 = scmp.ne.s32.totalorder %s71, %s85
    %p87 = scmp.eq.s32.totalorder %s19, 0
    %p88 = por %p86, %p87
    %s90 = sadd.s32 %s89, 1
    %p93 = scmp.eq.s32.totalorder %s13, 1
    %p94 = scmp.ne.s32.totalorder %s89, %s91
    %p95 = scmp.eq.s32.totalorder %s13, 0
    %p96 = por %p94, %p95
    %p97 = scmp.ne.s32.totalorder %s89, %s91
    %p98 = scmp.eq.s32.totalorder %s18, 1
    %p99 = por %p97, %p98
    %p100 = scmp.ne.s32.totalorder %s91, %s92
    %p101 = scmp.eq.s32.totalorder %s18, 0
    %p102 = por %p100, %p101
    %p103 = scmp.ne.s32.totalorder %s91, %s92
    %p104 = scmp.eq.s32.totalorder %s19, 1
    %p105 = por %p103, %p104
    %p107 = scmp.ne.s32.totalorder %s92, %s106
    %p108 = scmp.eq.s32.totalorder %s19, 0
    %p109 = por %p107, %p108
    %s110 = ssub.s32 %s13, %s20
    %p111 = scmp.eq.s32.totalorder %s110, 0
    %s113 = sadd.s32 %s112, 1
    %s114 = scalar_select %p111, %s112, %s113
    %p117 = pneg %p111
    %p118 = scmp.eq.s32.totalorder %s13, 1
    %p119 = por %p117, %p118
    %p120 = scmp.ne.s32.totalorder %s112, %s115
    %p121 = scmp.eq.s32.totalorder %s13, 0
    %p122 = por %p120, %p121
    %p123 = scmp.ne.s32.totalorder %s112, %s115
    %p124 = scmp.eq.s32.totalorder %s18, 1
    %p125 = por %p123, %p124
    %p126 = scmp.ne.s32.totalorder %s115, %s116
    %p127 = scmp.eq.s32.totalorder %s18, 0
    %p128 = por %p126, %p127
    %p129 = scmp.ne.s32.totalorder %s115, %s116
    %p130 = scmp.eq.s32.totalorder %s19, 1
    %p131 = por %p129, %p130
    %p133 = scmp.ne.s32.totalorder %s116, %s132
    %p134 = scmp.eq.s32.totalorder %s19, 0
    %p135 = por %p133, %p134
    %s136 = ssub.s32 %s13, %s20
    %p137 = scmp.eq.s32.totalorder %s136, 0
    %s139 = sadd.s32 %s138, 1
    %s140 = scalar_select %p137, %s138, %s139
    %p143 = pneg %p137
    %p144 = scmp.eq.s32.totalorder %s13, 1
    %p145 = por %p143, %p144
    %p146 = scmp.ne.s32.totalorder %s138, %s141
    %p147 = scmp.eq.s32.totalorder %s13, 0
    %p148 = por %p146, %p147
    %p149 = scmp.ne.s32.totalorder %s138, %s141
    %p150 = scmp.eq.s32.totalorder %s18, 1
    %p151 = por %p149, %p150
    %p152 = scmp.ne.s32.totalorder %s141, %s142
    %p153 = scmp.eq.s32.totalorder %s18, 0
    %p154 = por %p152, %p153
    %p155 = scmp.ne.s32.totalorder %s141, %s142
    %p156 = scmp.eq.s32.totalorder %s19, 1
    %p157 = por %p155, %p156
    %p159 = scmp.ne.s32.totalorder %s142, %s158
    %p160 = scmp.eq.s32.totalorder %s19, 0
    %p161 = por %p159, %p160
    %s162 = ssub.s32 %s13, %s20
    %p163 = scmp.eq.s32.totalorder %s162, 0
    %s165 = sadd.s32 %s164, 1
    %s166 = scalar_select %p163, %s164, %s165
    %p169 = pneg %p163
    %p170 = scmp.eq.s32.totalorder %s13, 1
    %p171 = por %p169, %p170
    %p172 = scmp.ne.s32.totalorder %s164, %s167
    %p173 = scmp.eq.s32.totalorder %s13, 0
    %p174 = por %p172, %p173
    %p175 = scmp.ne.s32.totalorder %s164, %s167
    %p176 = scmp.eq.s32.totalorder %s18, 1
    %p177 = por %p175, %p176
    %p178 = scmp.ne.s32.totalorder %s167, %s168
    %p179 = scmp.eq.s32.totalorder %s18, 0
    %p180 = por %p178, %p179
    %p181 = scmp.ne.s32.totalorder %s167, %s168
    %p182 = scmp.eq.s32.totalorder %s19, 1
    %p183 = por %p181, %p182
    %p185 = scmp.ne.s32.totalorder %s168, %s184
    %p186 = scmp.eq.s32.totalorder %s19, 0
    %p187 = por %p185, %p186
    %p188 = scmp.le.s32.totalorder 1, %s13
    %p189 = scmp.lt.s32.totalorder %s13, 3
    %p190 = pnand %p188, %p189
    %p191 = pneg %p190
    // Predicated region
    $region9: #{res_block_up_flat.4} parent=5 // pred_check
      _
    $region10: #{res_block_up_flat.4} parent=5 // pred_check_branch
      %193 = sbr.rel (%p190) target = $region12
    $region11: #{res_block_up_flat.4} parent=5 // pred_region
      %s194 = ssub.s32 %s13, 1
      // Predicated region
      $region13: #{res_block_up_flat.4} parent=11 // pred_check
        %p195 = pneg %p60
      $region14: #{res_block_up_flat.4} parent=11 // pred_check_branch
        %197 = sbr.rel (%p195) target = $region16
      $region15: #{res_block_up_flat.4} parent=11 // pred_region
        _
      $region16: #{res_block_up_flat.4} parent=11 // pred_fallthru
        _
      // Predicated region
      $region17: #{res_block_up_flat.4} parent=11 // pred_check
        %p198 = pneg %p81
      $region18: #{res_block_up_flat.4} parent=11 // pred_check_branch
        %200 = sbr.rel (%p198) target = $region20
      $region19: #{res_block_up_flat.4} parent=11 // pred_region
        _
      $region20: #{res_block_up_flat.4} parent=11 // pred_fallthru
        _
      // Predicated region
      $region21: #{res_block_up_flat.4} parent=11 // pred_check
        %p201 = pneg %p102
      $region22: #{res_block_up_flat.4} parent=11 // pred_check_branch
        %203 = sbr.rel (%p201) target = $region24
      $region23: #{res_block_up_flat.4} parent=11 // pred_region
        _
      $region24: #{res_block_up_flat.4} parent=11 // pred_fallthru
        _
    $region12: #{res_block_up_flat.4} parent=5 // pred_fallthru
      _
    %p204 = scmp.lt.s32.totalorder %s13, 2
    // Predicated region
    $region25: #{res_block_up_flat.4} parent=5 // pred_check
      %p205 = pneg %p204
    $region26: #{res_block_up_flat.4} parent=5 // pred_check_branch
      %207 = sbr.rel (%p205) target = $region28
    $region27: #{res_block_up_flat.4} parent=5 // pred_region
      // Predicated region
      $region29: #{res_block_up_flat.4} parent=27 // pred_check
        %p208 = pneg %p33
      $region30: #{res_block_up_flat.4} parent=27 // pred_check_branch
        %210 = sbr.rel (%p208) target = $region32
      $region31: #{res_block_up_flat.4} parent=27 // pred_region
        %s211 = smul.u32 4, %s13
        %p212 = scmp.lt.s32.totalorder %s211, 7
        %s213 = scalar_select %p212, %s211, 7
        %s214 = smul.addr %s213, 8
        %s215 = scalar_lea.vmem %s0, %s214
        %s216 = smul.u32 4, %s13
      $region32: #{res_block_up_flat.4} parent=27 // pred_fallthru
        _
    $region28: #{res_block_up_flat.4} parent=5 // pred_fallthru
      _
    %p217 = scmp.le.s32.totalorder 1, %s13
    %p218 = scmp.lt.s32.totalorder %s13, 3
    %p219 = pnand %p217, %p218
    %p220 = pneg %p219
    // Predicated region
    $region33: #{res_block_up_flat.4} parent=5 // pred_check
      _
    $region34: #{res_block_up_flat.4} parent=5 // pred_check_branch
      %222 = sbr.rel (%p219) target = $region36
    $region35: #{res_block_up_flat.4} parent=5 // pred_region
      %s223 = ssub.s32 %s13, 1
      %s224 = smul.u32 4, %s18
      %p225 = scmp.lt.s32.totalorder %s224, 7
      %s226 = scalar_select %p225, %s224, 7
      %s227 = smul.addr %s226, 8
      %s228 = scalar_lea.vmem %s0, %s227
      %p229 = pneg %p39
      %p230 = pneg %p36
      %p231 = pneg %p60
      %p232 = pneg %p57
      %p233 = pneg %p81
      %p234 = pneg %p78
      %p235 = pneg %p102
      %p236 = pneg %p99
      %p237 = pneg %p128
      %p238 = pneg %p125
      %s239 = smul.u32 4, %s18
      %p240 = scmp.lt.s32.totalorder %s239, 7
      %s241 = scalar_select %p240, %s239, 7
      %s242 = smul.addr %s241, 8
      %s243 = scalar_lea.vmem %s4, %s242
      %p244 = pneg %p154
      %p245 = pneg %p151
      %p246 = scmp.lt.s32.totalorder %s18, 1
      %s247 = scalar_select %p246, %s18, 1
      %s248 = scalar_lea.vmem %s5, %s247
      %p249 = pneg %p180
      %p250 = pneg %p177
      %p251 = scmp.lt.s32.totalorder %s18, 1
      %s252 = scalar_select %p251, %s18, 1
      %s253 = scalar_lea.vmem %s6, %s252
      %s254 = smul.u32 4, %s18
      %p255 = scmp.lt.s32.totalorder %s254, 7
      %s256 = scalar_select %p255, %s254, 7
      %s257 = smul.addr %s256, 8
      %s258 = scalar_lea.vmem %s0, %s257
      %s259 = smul.u32 4, %s18
      %s260 = smul.u32 4, %s18
      %p261 = scmp.lt.s32.totalorder %s260, 7
      %s262 = scalar_select %p261, %s260, 7
      %s263 = smul.addr %s262, 8
      %s264 = scalar_lea.vmem %s4, %s263
      %s265 = smul.u32 4, %s18
      %p266 = scmp.lt.s32.totalorder %s18, 1
      %s267 = scalar_select %p266, %s18, 1
      %s268 = scalar_lea.vmem %s5, %s267
      %p269 = scmp.lt.s32.totalorder %s18, 1
      %s270 = scalar_select %p269, %s18, 1
      %s271 = scalar_lea.vmem %s6, %s270
      %v272 = vld [vmem:[%s258] sm:$0xff]
      %v273 = vld [vmem:[%s258 + $0x8] sm:$0xff]
      %v274 = vld [vmem:[%s258 + $0x10] sm:$0xff]
      %v275 = vld [vmem:[%s258 + $0x18] sm:$0xff]
      %v276 = vld [vmem:[%s1] sm:$0x1]
      %v278 = vlaneseq
      %v279 = vshrl.u32 %v278, 7
      %v280 = vsub.s32 0, %v279
      %v281 = vrot.slane %v276, %v280
      %v283 = vmul.f32 %v272, %v281
      %v284 = vmul.f32 %v273, %v281
      %v285 = vmul.f32 %v274, %v281
      %v286 = vmul.f32 %v275, %v281
      %v287 = vld [vmem:[%s2] sm:$0x1]
      %v289 = vlaneseq
      %v290 = vshrl.u32 %v289, 7
      %v291 = vsub.s32 0, %v290
      %v292 = vrot.slane %v287, %v291
      %v294 = vadd.f32 %v283, %v292
      %v295 = vadd.f32 %v284, %v292
      %v296 = vadd.f32 %v285, %v292
      %v297 = vadd.f32 %v286, %v292
      %v298 = vmax.f32 %v294, 0.0
      %v299 = vmax.f32 %v295, 0.0
      %v300 = vmax.f32 %v296, 0.0
      %v301 = vmax.f32 %v297, 0.0
      %v302 = vld [vmem:[%s3] sm:$0xff]
      %v303 = vld [vmem:[%s3 + $0x8] sm:$0xff]
      %v304 = vld [vmem:[%s3 + $0x10] sm:$0xff]
      %v305 = vld [vmem:[%s3 + $0x18] sm:$0xff]
      %v306 = vld [vmem:[%s3 + $0x20] sm:$0xff]
      %v307 = vld [vmem:[%s3 + $0x28] sm:$0xff]
      %v308 = vld [vmem:[%s3 + $0x30] sm:$0xff]
      %v309 = vld [vmem:[%s3 + $0x38] sm:$0xff]
      %v310 = vld [vmem:[%s3 + $0x40] sm:$0xff]
      %v311 = vld [vmem:[%s3 + $0x48] sm:$0xff]
      %v312 = vld [vmem:[%s3 + $0x50] sm:$0xff]
      %v313 = vld [vmem:[%s3 + $0x58] sm:$0xff]
      %v314 = vld [vmem:[%s3 + $0x60] sm:$0xff]
      %v315 = vld [vmem:[%s3 + $0x68] sm:$0xff]
      %v316 = vld [vmem:[%s3 + $0x70] sm:$0xff]
      %v317 = vld [vmem:[%s3 + $0x78] sm:$0xff]
      %318 = vmatprep.subr.mxu0 0.0
      %319 = vmatpush1.msra.mxu0 %v302
      %320 = vmatprep.subr.mxu0 0.0
      %321 = vmatpush1.msra.mxu0 %v303
      %322 = vmatprep.subr.mxu0 0.0
      %323 = vmatpush1.msra.mxu0 %v304
      %324 = vmatprep.subr.mxu0 0.0
      %325 = vmatpush1.msra.mxu0 %v305
      %326 = vmatprep.subr.mxu0 0.0
      %327 = vmatpush1.msra.mxu0 %v306
      %328 = vmatprep.subr.mxu0 0.0
      %329 = vmatpush1.msra.mxu0 %v307
      %330 = vmatprep.subr.mxu0 0.0
      %331 = vmatpush1.msra.mxu0 %v308
      %332 = vmatprep.subr.mxu0 0.0
      %333 = vmatpush1.msra.mxu0 %v309
      %334 = vmatprep.subr.mxu0 0.0
      %335 = vmatpush1.msra.mxu0 %v310
      %336 = vmatprep.subr.mxu0 0.0
      %337 = vmatpush1.msra.mxu0 %v311
      %338 = vmatprep.subr.mxu0 0.0
      %339 = vmatpush1.msra.mxu0 %v312
      %340 = vmatprep.subr.mxu0 0.0
      %341 = vmatpush1.msra.mxu0 %v313
      %342 = vmatprep.subr.mxu0 0.0
      %343 = vmatpush1.msra.mxu0 %v314
      %344 = vmatprep.subr.mxu0 0.0
      %345 = vmatpush1.msra.mxu0 %v315
      %346 = vmatprep.subr.mxu0 0.0
      %347 = vmatpush1.msra.mxu0 %v316
      %348 = vmatprep.subr.mxu0 0.0
      %349 = vmatpush1.msra.mxu0 %v317
      %350 = vmatprep.subr.mxu0 0.0
      %351 = vmatpush1.msra.mxu0 0.0
      %352 = vmatprep.subr.mxu0 0.0
      %353 = vmatpush1.msra.mxu0 0.0
      %354 = vmatprep.subr.mxu0 0.0
      %355 = vmatpush1.msra.mxu0 0.0
      %356 = vmatprep.subr.mxu0 0.0
      %357 = vmatpush1.msra.mxu0 0.0
      %358 = vmatprep.subr.mxu0 0.0
      %359 = vmatpush1.msra.mxu0 0.0
      %360 = vmatprep.subr.mxu0 0.0
      %361 = vmatpush1.msra.mxu0 0.0
      %362 = vmatprep.subr.mxu0 0.0
      %363 = vmatpush1.msra.mxu0 0.0
      %364 = vmatprep.subr.mxu0 0.0
      %365 = vmatpush1.msra.mxu0 0.0
      %366 = vmatprep.subr.mxu0 0.0
      %367 = vmatpush1.msra.mxu0 0.0
      %368 = vmatprep.subr.mxu0 0.0
      %369 = vmatpush1.msra.mxu0 0.0
      %370 = vmatprep.subr.mxu0 0.0
      %371 = vmatpush1.msra.mxu0 0.0
      %372 = vmatprep.subr.mxu0 0.0
      %373 = vmatpush1.msra.mxu0 0.0
      %374 = vmatprep.subr.mxu0 0.0
      %375 = vmatpush1.msra.mxu0 0.0
      %376 = vmatprep.subr.mxu0 0.0
      %377 = vmatpush1.msra.mxu0 0.0
      %378 = vmatprep.subr.mxu0 0.0
      %379 = vmatpush1.msra.mxu0 0.0
      %380 = vmatprep.subr.mxu0 0.0
      %381 = vmatpush1.msra.mxu0 0.0
      %382 = vmatprep.mubr.f32.mxu0 0.0
      %383 = vmatmul.mubr.f32.gmra.mrb[0].mxu0 %v298
      %v384 = vpop.f32.mrb[0].mxu0
      %v385 = vadd.f32 0.0, %v384
      %v386 = vpop.f32.mrb[0].mxu0
      %387 = vmatprep.mubr.f32.mxu0 0.0
      %388 = vmatmul.mubr.f32.gmra.mrb[0].mxu0 %v299
      %v389 = vpop.f32.mrb[0].mxu0
      %v390 = vadd.f32 0.0, %v389
      %v391 = vpop.f32.mrb[0].mxu0
      %392 = vmatprep.mubr.f32.mxu0 0.0
      %393 = vmatmul.mubr.f32.gmra.mrb[0].mxu0 %v300
      %v394 = vpop.f32.mrb[0].mxu0
      %v395 = vadd.f32 0.0, %v394
      %v396 = vpop.f32.mrb[0].mxu0
      %397 = vmatprep.mubr.f32.mxu0 0.0
      %398 = vmatmul.mubr.f32.gmra.mrb[0].mxu0 %v301
      %v399 = vpop.f32.mrb[0].mxu0
      %v400 = vadd.f32 0.0, %v399
      %v401 = vpop.f32.mrb[0].mxu0
      %402 = vdwg.mxu0
      %403 = vst [vmem:[%s264] sm:$0xff] %v385
      %404 = vst [vmem:[%s264 + $0x8] sm:$0xff] %v390
      %405 = vst [vmem:[%s264 + $0x10] sm:$0xff] %v395
      %406 = vst [vmem:[%s264 + $0x18] sm:$0xff] %v400
      %v407 = vadd.f32 %v385, %v390
      %v408 = vadd.f32 %v407, %v395
      %v409 = vadd.f32 %v408, %v400
      %v410 = vrot.slane %v409, 4
      %v411 = vadd.f32 %v409, %v410
      %v412 = vrot.slane %v411, 2
      %v413 = vadd.f32 %v411, %v412
      %v414 = vrot.slane %v413, 1
      %v415 = vadd.f32 %v413, %v414
      %416 = vst [vmem:[%s268] sm:$0x1] %v415
      %v417 = vmul.f32 %v385, %v385
      %v418 = vmul.f32 %v390, %v390
      %v419 = vmul.f32 %v395, %v395
      %v420 = vmul.f32 %v400, %v400
      %v421 = vadd.f32 %v417, %v418
      %v422 = vadd.f32 %v421, %v419
      %v423 = vadd.f32 %v422, %v420
      %v424 = vrot.slane %v423, 4
      %v425 = vadd.f32 %v423, %v424
      %v426 = vrot.slane %v425, 2
      %v427 = vadd.f32 %v425, %v426
      %v428 = vrot.slane %v427, 1
      %v429 = vadd.f32 %v427, %v428
      %430 = vst [vmem:[%s271] sm:$0x1] %v429
      %s431 = smul.u32 4, %s18
      %p432 = scmp.lt.s32.totalorder %s431, 7
      %s433 = scalar_select %p432, %s431, 7
      %s434 = smul.addr %s433, 8
      %s435 = scalar_lea.vmem %s4, %s434
      %p436 = scmp.lt.s32.totalorder %s18, 1
      %s437 = scalar_select %p436, %s18, 1
      %s438 = scalar_lea.vmem %s5, %s437
      %p439 = scmp.lt.s32.totalorder %s18, 1
      %s440 = scalar_select %p439, %s18, 1
      %s441 = scalar_lea.vmem %s6, %s440
      // Predicated region
      $region37: #{res_block_up_flat.4} parent=35 // pred_check
        %p442 = pneg %p125
      $region38: #{res_block_up_flat.4} parent=35 // pred_check_branch
        %444 = sbr.rel (%p442) target = $region40
      $region39: #{res_block_up_flat.4} parent=35 // pred_region
        %s445 = smul.u32 4, %s18
      $region40: #{res_block_up_flat.4} parent=35 // pred_fallthru
        _
      // Predicated region
      $region41: #{res_block_up_flat.4} parent=35 // pred_check
        %p446 = pneg %p151
      $region42: #{res_block_up_flat.4} parent=35 // pred_check_branch
        %448 = sbr.rel (%p446) target = $region44
      $region43: #{res_block_up_flat.4} parent=35 // pred_region
        _
      $region44: #{res_block_up_flat.4} parent=35 // pred_fallthru
        _
      // Predicated region
      $region45: #{res_block_up_flat.4} parent=35 // pred_check
        %p449 = pneg %p177
      $region46: #{res_block_up_flat.4} parent=35 // pred_check_branch
        %451 = sbr.rel (%p449) target = $region48
      $region47: #{res_block_up_flat.4} parent=35 // pred_region
        _
      $region48: #{res_block_up_flat.4} parent=35 // pred_fallthru
        _
    $region36: #{res_block_up_flat.4} parent=5 // pred_fallthru
      _
    %p452 = scmp.le.s32.totalorder 2, %s13
    // Predicated region
    $region49: #{res_block_up_flat.4} parent=5 // pred_check
      %p453 = pneg %p452
    $region50: #{res_block_up_flat.4} parent=5 // pred_check_branch
      %455 = sbr.rel (%p453) target = $region52
    $region51: #{res_block_up_flat.4} parent=5 // pred_region
      %s456 = ssub.s32 %s13, 2
      // Predicated region
      $region53: #{res_block_up_flat.4} parent=51 // pred_check
        %p457 = pneg %p131
      $region54: #{res_block_up_flat.4} parent=51 // pred_check_branch
        %459 = sbr.rel (%p457) target = $region56
      $region55: #{res_block_up_flat.4} parent=51 // pred_region
        %s460 = smul.u32 4, %s19
        %p461 = scmp.lt.s32.totalorder %s460, 7
        %s462 = scalar_select %p461, %s460, 7
        %s463 = smul.addr %s462, 8
        %s464 = scalar_lea.vmem %s4, %s463
      $region56: #{res_block_up_flat.4} parent=51 // pred_fallthru
        _
      // Predicated region
      $region57: #{res_block_up_flat.4} parent=51 // pred_check
        %p465 = pneg %p157
      $region58: #{res_block_up_flat.4} parent=51 // pred_check_branch
        %467 = sbr.rel (%p465) target = $region60
      $region59: #{res_block_up_flat.4} parent=51 // pred_region
        %p468 = scmp.lt.s32.totalorder %s19, 1
        %s469 = scalar_select %p468, %s19, 1
        %s470 = scalar_lea.vmem %s5, %s469
      $region60: #{res_block_up_flat.4} parent=51 // pred_fallthru
        _
      // Predicated region
      $region61: #{res_block_up_flat.4} parent=51 // pred_check
        %p471 = pneg %p183
      $region62: #{res_block_up_flat.4} parent=51 // pred_check_branch
        %473 = sbr.rel (%p471) target = $region64
      $region63: #{res_block_up_flat.4} parent=51 // pred_region
        %p474 = scmp.lt.s32.totalorder %s19, 1
        %s475 = scalar_select %p474, %s19, 1
        %s476 = scalar_lea.vmem %s6, %s475
      $region64: #{res_block_up_flat.4} parent=51 // pred_fallthru
        _
    $region52: #{res_block_up_flat.4} parent=5 // pred_fallthru
      _
  $region6: #{res_block_up_flat.4} parent=0 // loop_footer
    %s17 = sadd.s32 1, %s13
  $region7: #{res_block_up_flat.4} parent=0 // loop_footer_branch
    %12 = sbr.rel target = $region3
  $region8: #{res_block_up_flat.4} parent=0 // loop_exit
    _

</llo_original>
